<compile_context>
chip_gen: v7x
topology: tpu7x:2x2x1
jax: 0.10.0
libtpu: 0.0.40
codegen_flags: <defaults>
</compile_context>

<pallas_src>
import jax
import jax.numpy as jnp
from jax.experimental import pallas as pl
from jax.experimental.pallas import tpu as pltpu


def sam_kernel(x_ref, p_ref, o_ref):
    # x_ref: (B, H, W) with B = N*C     (input, batch and channel collapsed)
    # p_ref: (Cin, H + W + 2)           (packed [wh | ww | bh | bw])
    # o_ref: (N, Cin, H, W)             (output)
    B, H, W = x_ref.shape
    N, Cin = o_ref.shape[0], o_ref.shape[1]
    C = B // N

    # Unpack parameters (static slices of a single VMEM tile).
    p = p_ref[...]
    wh = p[:, :H]                                     # (Cin, H)
    ww = p[:, H:H + W]                                # (Cin, W)
    bh = p[:, H + W:H + W + 1].astype(jnp.float32)    # (Cin, 1)
    bw = p[:, H + W + 1:].astype(jnp.float32)         # (Cin, 1)

    xb = x_ref[...]                                   # (B, H, W)

    # Broadcast the 1x1-conv weights along the batch dim (hoisted, VPU-cheap) so
    # both contractions are standard leading-batch MXU matmuls.
    wh_b = jnp.broadcast_to(wh, (B, Cin, H))
    ww_b = jnp.broadcast_to(ww, (B, Cin, W))

    # ham: yh[(n,c), o, w] = sum_h Wh[o,h] * x[n,c,h,w] + bh[o]     ('bij,bjk->bik')
    yh = jax.lax.dot_general(
        wh_b, xb, (((2,), (1,)), ((0,), (0,))),
        preferred_element_type=jnp.float32) + bh[None]              # (B, Cin, W)

    # wam: yw[(n,c), o, h] = sum_w Ww[o,w] * x[n,c,h,w] + bw[o]     ('bij,bkj->bik')
    yw = jax.lax.dot_general(
        ww_b, xb, (((2,), (2,)), ((0,), (0,))),
        preferred_element_type=jnp.float32) + bw[None]              # (B, Cin, H)

    # y[n,o,h,w] = sigmoid( sum_c yw[(n,c),o,h] * yh[(n,c),o,w] )
    # Static unroll (N=2, C=4); each term is a broadcast outer-product MAC kept in
    # the output's (Cin, H, W) layout.  Bias is already inside every per-c term.
    for n in range(N):
        acc = None
        for c in range(C):
            b = n * C + c
            term = yw[b][:, :, None] * yh[b][:, None, :]            # (Cin, H, W)
            acc = term if acc is None else acc + term
        o_ref[n] = jax.nn.sigmoid(acc).astype(o_ref.dtype)


@jax.jit
def sam_forward(x, wh, bh, ww, bw):
    """x: (N, C, H, W); wh: (Cin, H); bh: (Cin,); ww: (Cin, W); bw: (Cin,)."""
    N, C, H, W = x.shape
    Cin = wh.shape[0]
    assert wh.shape == (Cin, H) and ww.shape == (Cin, W)
    assert bh.shape == (Cin,) and bw.shape == (Cin,)

    # Free metadata reshape: collapse (N, C) so the kernel sees one batch axis.
    xb = x.reshape(N * C, H, W)
    # Pack all parameters into a single operand: [wh | ww | bh | bw] -> (Cin, H+W+2).
    params = jnp.concatenate([wh, ww, bh[:, None], bw[:, None]], axis=1)

    return pl.pallas_call(
        sam_kernel,
        out_shape=jax.ShapeDtypeStruct((N, Cin, H, W), x.dtype),
        grid=(1,),                                     # single invocation
        in_specs=[
            pl.BlockSpec((N * C, H, W), lambda i: (0, 0, 0)),        # x (one DMA)
            pl.BlockSpec((Cin, H + W + 2), lambda i: (0, 0)),        # packed params
        ],
        out_specs=pl.BlockSpec((N, Cin, H, W), lambda i: (0, 0, 0, 0)),
    )(xb, params)


def sam_reference(x, wh, bh, ww, bw):
    """Pure-JAX reference matching the PyTorch forward exactly."""
    yh = jnp.einsum('oh,nchw->nocw', wh, x) + bh[None, :, None, None]
    yw = jnp.einsum('ow,nchw->nohc', ww, x) + bw[None, :, None, None]
    y = jnp.einsum('nohc,nocw->nohw', yw, yh)
    return jax.nn.sigmoid(y)


if __name__ == "__main__":
    # SAM(in_channels=4, width=16, height=16) applied to x of shape (2, 4, 16, 16).
    N, C, H, W = 2, 4, 16, 16
    Cin = C  # out channels of both 1x1 convs

    key = jax.random.PRNGKey(0)
    k1, k2, k3, k4, k5 = jax.random.split(key, 5)
    x = jax.random.normal(k1, (N, C, H, W), dtype=jnp.float32)

    # Deterministic synthetic parameters (Conv2d(H->Cin,1) and Conv2d(W->Cin,1)),
    # uniform(-1/sqrt(fan_in), 1/sqrt(fan_in)) like PyTorch's default init.
    lim_h = 1.0 / (H ** 0.5)
    lim_w = 1.0 / (W ** 0.5)
    wh = jax.random.uniform(k2, (Cin, H), minval=-lim_h, maxval=lim_h, dtype=jnp.float32)
    bh = jax.random.uniform(k3, (Cin,), minval=-lim_h, maxval=lim_h, dtype=jnp.float32)
    ww = jax.random.uniform(k4, (Cin, W), minval=-lim_w, maxval=lim_w, dtype=jnp.float32)
    bw = jax.random.uniform(k5, (Cin,), minval=-lim_w, maxval=lim_w, dtype=jnp.float32)

    out = jax.block_until_ready(sam_forward(x, wh, bh, ww, bw))
    ref = jax.block_until_ready(sam_reference(x, wh, bh, ww, bw))

    assert out.shape == (N, Cin, H, W), out.shape
    assert jnp.allclose(out, ref, atol=1e-5, rtol=1e-5), float(jnp.max(jnp.abs(out - ref)))
    print("KERNEL_OK")
</pallas_src>

<mosaic_0001>
module attributes {stable_mosaic.version = 11 : i64} {
  func.func @sam_kernel(%arg0: i32, %arg1: memref<8x16x16xf32, #tpu.memory_space<vmem>>, %arg2: memref<4x34xf32, #tpu.memory_space<vmem>>, %arg3: memref<2x4x16x16xf32, #tpu.memory_space<vmem>>) attributes {dimension_semantics = [#tpu.dimension_semantics<arbitrary>], iteration_bounds = array<i64: 1>, scalar_prefetch = 0 : i64, scratch_operands = 0 : i64, tpu.core_type = #tpu.core_type<tc>, window_params = [{pipeline_mode = #tpu.pipeline_mode<synchronous>, transform_indices = @transform_0, window_bounds = array<i64: 8, 16, 16>}, {pipeline_mode = #tpu.pipeline_mode<synchronous>, transform_indices = @transform_1, window_bounds = array<i64: 4, 34>}, {pipeline_mode = #tpu.pipeline_mode<synchronous>, transform_indices = @transform_2, window_bounds = array<i64: 2, 4, 16, 16>}]} {
    %c0 = arith.constant 0 : index
    %c0_0 = arith.constant 0 : index
    %0 = vector.load %arg2[%c0, %c0_0] : memref<4x34xf32, #tpu.memory_space<vmem>>, vector<4x34xf32>
    %1 = vector.extract_strided_slice %0 {offsets = [0, 0], sizes = [4, 16], strides = [1, 1]} : vector<4x34xf32> to vector<4x16xf32>
    %2 = vector.extract_strided_slice %0 {offsets = [0, 16], sizes = [4, 16], strides = [1, 1]} : vector<4x34xf32> to vector<4x16xf32>
    %3 = vector.extract_strided_slice %0 {offsets = [0, 32], sizes = [4, 1], strides = [1, 1]} : vector<4x34xf32> to vector<4x1xf32>
    %4 = vector.extract_strided_slice %0 {offsets = [0, 33], sizes = [4, 1], strides = [1, 1]} : vector<4x34xf32> to vector<4x1xf32>
    %c0_1 = arith.constant 0 : index
    %c0_2 = arith.constant 0 : index
    %c0_3 = arith.constant 0 : index
    %5 = vector.load %arg1[%c0_1, %c0_2, %c0_3] : memref<8x16x16xf32, #tpu.memory_space<vmem>>, vector<8x16x16xf32>
    %6 = vector.shape_cast %1 : vector<4x16xf32> to vector<1x4x16xf32>
    %7 = vector.broadcast %6 : vector<1x4x16xf32> to vector<8x4x16xf32>
    %8 = vector.shape_cast %2 : vector<4x16xf32> to vector<1x4x16xf32>
    %9 = vector.broadcast %8 : vector<1x4x16xf32> to vector<8x4x16xf32>
    %cst = arith.constant dense<0.000000e+00> : vector<8x4x16xf32>
    %10 = tpu.matmul %7, %5, %cst {dimension_numbers = #tpu.dot_dimension_numbers<[2], [1], [1], [2], [0, 0, 0, 1, 1, 2], [0], [0]>} : vector<8x4x16xf32>, vector<8x16x16xf32>, vector<8x4x16xf32> -> vector<8x4x16xf32>
    %11 = vector.shape_cast %3 : vector<4x1xf32> to vector<1x4x1xf32>
    %12 = vector.broadcast %11 : vector<1x4x1xf32> to vector<8x4x16xf32>
    %13 = arith.addf %10, %12 : vector<8x4x16xf32>
    %cst_4 = arith.constant dense<0.000000e+00> : vector<8x4x16xf32>
    %14 = tpu.matmul %9, %5, %cst_4 {dimension_numbers = #tpu.dot_dimension_numbers<[2], [2], [1], [1], [0, 0, 0, 1, 1, 1], [0], [0]>} : vector<8x4x16xf32>, vector<8x16x16xf32>, vector<8x4x16xf32> -> vector<8x4x16xf32>
    %15 = vector.shape_cast %4 : vector<4x1xf32> to vector<1x4x1xf32>
    %16 = vector.broadcast %15 : vector<1x4x1xf32> to vector<8x4x16xf32>
    %17 = arith.addf %14, %16 : vector<8x4x16xf32>
    %18 = vector.extract_strided_slice %17 {offsets = [0, 0, 0], sizes = [1, 4, 16], strides = [1, 1, 1]} : vector<8x4x16xf32> to vector<1x4x16xf32>
    %19 = vector.shape_cast %18 : vector<1x4x16xf32> to vector<4x16xf32>
    %20 = vector.shape_cast %19 : vector<4x16xf32> to vector<4x16x1xf32>
    %21 = vector.extract_strided_slice %13 {offsets = [0, 0, 0], sizes = [1, 4, 16], strides = [1, 1, 1]} : vector<8x4x16xf32> to vector<1x4x16xf32>
    %22 = vector.shape_cast %21 : vector<1x4x16xf32> to vector<4x16xf32>
    %23 = vector.shape_cast %22 : vector<4x16xf32> to vector<4x1x16xf32>
    %24 = vector.broadcast %20 : vector<4x16x1xf32> to vector<4x16x16xf32>
    %25 = vector.broadcast %23 : vector<4x1x16xf32> to vector<4x16x16xf32>
    %26 = arith.mulf %24, %25 : vector<4x16x16xf32>
    %27 = vector.extract_strided_slice %17 {offsets = [1, 0, 0], sizes = [1, 4, 16], strides = [1, 1, 1]} : vector<8x4x16xf32> to vector<1x4x16xf32>
    %28 = vector.shape_cast %27 : vector<1x4x16xf32> to vector<4x16xf32>
    %29 = vector.shape_cast %28 : vector<4x16xf32> to vector<4x16x1xf32>
    %30 = vector.extract_strided_slice %13 {offsets = [1, 0, 0], sizes = [1, 4, 16], strides = [1, 1, 1]} : vector<8x4x16xf32> to vector<1x4x16xf32>
    %31 = vector.shape_cast %30 : vector<1x4x16xf32> to vector<4x16xf32>
    %32 = vector.shape_cast %31 : vector<4x16xf32> to vector<4x1x16xf32>
    %33 = vector.broadcast %29 : vector<4x16x1xf32> to vector<4x16x16xf32>
    %34 = vector.broadcast %32 : vector<4x1x16xf32> to vector<4x16x16xf32>
    %35 = arith.mulf %33, %34 : vector<4x16x16xf32>
    %36 = arith.addf %26, %35 : vector<4x16x16xf32>
    %37 = vector.extract_strided_slice %17 {offsets = [2, 0, 0], sizes = [1, 4, 16], strides = [1, 1, 1]} : vector<8x4x16xf32> to vector<1x4x16xf32>
    %38 = vector.shape_cast %37 : vector<1x4x16xf32> to vector<4x16xf32>
    %39 = vector.shape_cast %38 : vector<4x16xf32> to vector<4x16x1xf32>
    %40 = vector.extract_strided_slice %13 {offsets = [2, 0, 0], sizes = [1, 4, 16], strides = [1, 1, 1]} : vector<8x4x16xf32> to vector<1x4x16xf32>
    %41 = vector.shape_cast %40 : vector<1x4x16xf32> to vector<4x16xf32>
    %42 = vector.shape_cast %41 : vector<4x16xf32> to vector<4x1x16xf32>
    %43 = vector.broadcast %39 : vector<4x16x1xf32> to vector<4x16x16xf32>
    %44 = vector.broadcast %42 : vector<4x1x16xf32> to vector<4x16x16xf32>
    %45 = arith.mulf %43, %44 : vector<4x16x16xf32>
    %46 = arith.addf %36, %45 : vector<4x16x16xf32>
    %47 = vector.extract_strided_slice %17 {offsets = [3, 0, 0], sizes = [1, 4, 16], strides = [1, 1, 1]} : vector<8x4x16xf32> to vector<1x4x16xf32>
    %48 = vector.shape_cast %47 : vector<1x4x16xf32> to vector<4x16xf32>
    %49 = vector.shape_cast %48 : vector<4x16xf32> to vector<4x16x1xf32>
    %50 = vector.extract_strided_slice %13 {offsets = [3, 0, 0], sizes = [1, 4, 16], strides = [1, 1, 1]} : vector<8x4x16xf32> to vector<1x4x16xf32>
    %51 = vector.shape_cast %50 : vector<1x4x16xf32> to vector<4x16xf32>
    %52 = vector.shape_cast %51 : vector<4x16xf32> to vector<4x1x16xf32>
    %53 = vector.broadcast %49 : vector<4x16x1xf32> to vector<4x16x16xf32>
    %54 = vector.broadcast %52 : vector<4x1x16xf32> to vector<4x16x16xf32>
    %55 = arith.mulf %53, %54 : vector<4x16x16xf32>
    %56 = arith.addf %46, %55 : vector<4x16x16xf32>
    %57 = arith.negf %56 : vector<4x16x16xf32>
    %58 = math.exp %57 : vector<4x16x16xf32>
    %cst_5 = arith.constant 1.000000e+00 : f32
    %59 = vector.broadcast %cst_5 : f32 to vector<4x16x16xf32>
    %60 = arith.addf %59, %58 : vector<4x16x16xf32>
    %61 = arith.divf %59, %60 : vector<4x16x16xf32>
    %c0_6 = arith.constant 0 : index
    %c0_7 = arith.constant 0 : index
    %c0_8 = arith.constant 0 : index
    %c0_9 = arith.constant 0 : index
    %62 = vector.load %arg3[%c0_6, %c0_7, %c0_8, %c0_9] : memref<2x4x16x16xf32, #tpu.memory_space<vmem>>, vector<1x4x16x16xf32>
    %63 = vector.shape_cast %62 : vector<1x4x16x16xf32> to vector<4x16x16xf32>
    %64 = vector.shape_cast %61 : vector<4x16x16xf32> to vector<1x4x16x16xf32>
    tpu.vector_store %arg3[%c0_6, %c0_7, %c0_8, %c0_9], %64 {strides = array<i32>} : memref<2x4x16x16xf32, #tpu.memory_space<vmem>>, vector<1x4x16x16xf32>,
    %65 = vector.extract_strided_slice %17 {offsets = [4, 0, 0], sizes = [1, 4, 16], strides = [1, 1, 1]} : vector<8x4x16xf32> to vector<1x4x16xf32>
    %66 = vector.shape_cast %65 : vector<1x4x16xf32> to vector<4x16xf32>
    %67 = vector.shape_cast %66 : vector<4x16xf32> to vector<4x16x1xf32>
    %68 = vector.extract_strided_slice %13 {offsets = [4, 0, 0], sizes = [1, 4, 16], strides = [1, 1, 1]} : vector<8x4x16xf32> to vector<1x4x16xf32>
    %69 = vector.shape_cast %68 : vector<1x4x16xf32> to vector<4x16xf32>
    %70 = vector.shape_cast %69 : vector<4x16xf32> to vector<4x1x16xf32>
    %71 = vector.broadcast %67 : vector<4x16x1xf32> to vector<4x16x16xf32>
    %72 = vector.broadcast %70 : vector<4x1x16xf32> to vector<4x16x16xf32>
    %73 = arith.mulf %71, %72 : vector<4x16x16xf32>
    %74 = vector.extract_strided_slice %17 {offsets = [5, 0, 0], sizes = [1, 4, 16], strides = [1, 1, 1]} : vector<8x4x16xf32> to vector<1x4x16xf32>
    %75 = vector.shape_cast %74 : vector<1x4x16xf32> to vector<4x16xf32>
    %76 = vector.shape_cast %75 : vector<4x16xf32> to vector<4x16x1xf32>
    %77 = vector.extract_strided_slice %13 {offsets = [5, 0, 0], sizes = [1, 4, 16], strides = [1, 1, 1]} : vector<8x4x16xf32> to vector<1x4x16xf32>
    %78 = vector.shape_cast %77 : vector<1x4x16xf32> to vector<4x16xf32>
    %79 = vector.shape_cast %78 : vector<4x16xf32> to vector<4x1x16xf32>
    %80 = vector.broadcast %76 : vector<4x16x1xf32> to vector<4x16x16xf32>
    %81 = vector.broadcast %79 : vector<4x1x16xf32> to vector<4x16x16xf32>
    %82 = arith.mulf %80, %81 : vector<4x16x16xf32>
    %83 = arith.addf %73, %82 : vector<4x16x16xf32>
    %84 = vector.extract_strided_slice %17 {offsets = [6, 0, 0], sizes = [1, 4, 16], strides = [1, 1, 1]} : vector<8x4x16xf32> to vector<1x4x16xf32>
    %85 = vector.shape_cast %84 : vector<1x4x16xf32> to vector<4x16xf32>
    %86 = vector.shape_cast %85 : vector<4x16xf32> to vector<4x16x1xf32>
    %87 = vector.extract_strided_slice %13 {offsets = [6, 0, 0], sizes = [1, 4, 16], strides = [1, 1, 1]} : vector<8x4x16xf32> to vector<1x4x16xf32>
    %88 = vector.shape_cast %87 : vector<1x4x16xf32> to vector<4x16xf32>
    %89 = vector.shape_cast %88 : vector<4x16xf32> to vector<4x1x16xf32>
    %90 = vector.broadcast %86 : vector<4x16x1xf32> to vector<4x16x16xf32>
    %91 = vector.broadcast %89 : vector<4x1x16xf32> to vector<4x16x16xf32>
    %92 = arith.mulf %90, %91 : vector<4x16x16xf32>
    %93 = arith.addf %83, %92 : vector<4x16x16xf32>
    %94 = vector.extract_strided_slice %17 {offsets = [7, 0, 0], sizes = [1, 4, 16], strides = [1, 1, 1]} : vector<8x4x16xf32> to vector<1x4x16xf32>
    %95 = vector.shape_cast %94 : vector<1x4x16xf32> to vector<4x16xf32>
    %96 = vector.shape_cast %95 : vector<4x16xf32> to vector<4x16x1xf32>
    %97 = vector.extract_strided_slice %13 {offsets = [7, 0, 0], sizes = [1, 4, 16], strides = [1, 1, 1]} : vector<8x4x16xf32> to vector<1x4x16xf32>
    %98 = vector.shape_cast %97 : vector<1x4x16xf32> to vector<4x16xf32>
    %99 = vector.shape_cast %98 : vector<4x16xf32> to vector<4x1x16xf32>
    %100 = vector.broadcast %96 : vector<4x16x1xf32> to vector<4x16x16xf32>
    %101 = vector.broadcast %99 : vector<4x1x16xf32> to vector<4x16x16xf32>
    %102 = arith.mulf %100, %101 : vector<4x16x16xf32>
    %103 = arith.addf %93, %102 : vector<4x16x16xf32>
    %104 = arith.negf %103 : vector<4x16x16xf32>
    %105 = math.exp %104 : vector<4x16x16xf32>
    %cst_10 = arith.constant 1.000000e+00 : f32
    %106 = vector.broadcast %cst_10 : f32 to vector<4x16x16xf32>
    %107 = arith.addf %106, %105 : vector<4x16x16xf32>
    %108 = arith.divf %106, %107 : vector<4x16x16xf32>
    %c1 = arith.constant 1 : index
    %c0_11 = arith.constant 0 : index
    %c0_12 = arith.constant 0 : index
    %c0_13 = arith.constant 0 : index
    %109 = vector.load %arg3[%c1, %c0_11, %c0_12, %c0_13] : memref<2x4x16x16xf32, #tpu.memory_space<vmem>>, vector<1x4x16x16xf32>
    %110 = vector.shape_cast %109 : vector<1x4x16x16xf32> to vector<4x16x16xf32>
    %111 = vector.shape_cast %108 : vector<4x16x16xf32> to vector<1x4x16x16xf32>
    tpu.vector_store %arg3[%c1, %c0_11, %c0_12, %c0_13], %111 {strides = array<i32>} : memref<2x4x16x16xf32, #tpu.memory_space<vmem>>, vector<1x4x16x16xf32>,
    return
  }
  func.func @transform_0(%arg0: i32) -> (i32, i32, i32) {
    %c0_i32 = arith.constant 0 : i32
    %c0_i32_0 = arith.constant 0 : i32
    %c0_i32_1 = arith.constant 0 : i32
    %c0_i32_2 = arith.constant 0 : i32
    return %c0_i32, %c0_i32_0, %c0_i32_1 : i32, i32, i32
  }
  func.func @transform_1(%arg0: i32) -> (i32, i32) {
    %c0_i32 = arith.constant 0 : i32
    %c0_i32_0 = arith.constant 0 : i32
    %c0_i32_1 = arith.constant 0 : i32
    return %c0_i32, %c0_i32_0 : i32, i32
  }
  func.func @transform_2(%arg0: i32) -> (i32, i32, i32, i32) {
    %c0_i32 = arith.constant 0 : i32
    %c0_i32_0 = arith.constant 0 : i32
    %c0_i32_1 = arith.constant 0 : i32
    %c0_i32_2 = arith.constant 0 : i32
    %c0_i32_3 = arith.constant 0 : i32
    return %c0_i32, %c0_i32_0, %c0_i32_1, %c0_i32_2 : i32, i32, i32, i32
  }
}

</mosaic_0001>

<llo_original>
// kernel: sam_forward.1
$region0: #{sam_forward.1}
  #allocation0 [shape = 'u32[]', space=smem, size = 0x4, offset = 0x4, fixed_abs, tag = 'smem constant byte address 0x4 - core index']
  #allocation1 [shape = 'u32[144,128]{1,0:T(1,128)}', space=vmem, size = 0x12000, scoped, tag = 'internal scratch']
  %s0 = inlined_call_operand.hbm [shape: f32[8,16,16], index: 0, kind: input, shape index: {}]
  %s1 = inlined_call_operand.vmem [shape: f32[4,34], index: 1, kind: input, shape index: {}]
  %s2 = inlined_call_operand.hbm [shape: f32[2,4,16,16], index: 2, kind: output, shape index: {}]
  %s3 = sld [smem:[#allocation0]]
  $region22: #{sam_forward.1} parent=0
    _
  %s5 = ssub.s32 1, %s3
  %s6 = scalar_select 0, %s5, %s3
  $region1: #{sam_forward.1} parent=0
    #allocation2 [shape = 'u8[65536]{0}', space=vmem, size = 0x10000, scoped, tag = 'input window, operand 0, single buffered']
    #allocation3 [shape = 's32[1]{0}', space=sflag, size = 0x4, scoped, tag = 'scoped memory for sam_forward.1']
    #allocation4 [shape = 's32[1]{0}', space=sflag, size = 0x4, scoped, tag = 'scoped memory for sam_forward.1']
    #allocation5 [shape = 'u8[65536]{0}', space=vmem, size = 0x10000, scoped, tag = 'output window, operand 0, single buffered']
    %7 = vsyncpa [#allocation3], 0
    %8 = vsyncpa [#allocation4], 0
    // Predicated region
    $region2: #{sam_forward.1} parent=1 // pred_check
      _
    $region3: #{sam_forward.1} parent=1 // pred_check_branch
      %10 = sbr.rel (0) target = $region5
    $region4: #{sam_forward.1} parent=1 // pred_region
      %s12 = ssub.s32 2048, 2048
      %13 = vsyncadd [#allocation3], %s12
      %s14 = sshll.u32 [#allocation2], 4
      %s15 = int_to_ptr.vmem [resolvable:$true] %s14
      %20 = dma.hbm_to_vmem [thread:$0]  %s0, 2048, %s15, [#allocation3], 128, 128, 8
    $region5: #{sam_forward.1} parent=1 // pred_fallthru
      _
    // Predicated region
    $region6: #{sam_forward.1} parent=1 // pred_check
      _
    $region7: #{sam_forward.1} parent=1 // pred_check_branch
      %22 = sbr.rel (0) target = $region9
    $region8: #{sam_forward.1} parent=1 // pred_region
      _
    $region9: #{sam_forward.1} parent=1 // pred_fallthru
      _
    // Predicated region
    $region10: #{sam_forward.1} parent=1 // pred_check
      _
    $region11: #{sam_forward.1} parent=1 // pred_check_branch
      %24 = sbr.rel (0) target = $region13
    $region12: #{sam_forward.1} parent=1 // pred_region
      %25 = dma.done [#allocation3], 2048
    $region13: #{sam_forward.1} parent=1 // pred_fallthru
      _
    %v26 = vld [vmem:[%s1] sm:$0xf]
    %v27 = vld [vmem:[#allocation2] sm:$0xff]
    %v28 = vld [vmem:[#allocation2 + $0x8] sm:$0xff]
    %v29 = vld [vmem:[#allocation2 + $0x10] sm:$0xff]
    %v30 = vld [vmem:[#allocation2 + $0x18] sm:$0xff]
    %v31 = vld [vmem:[#allocation2 + $0x20] sm:$0xff]
    %v32 = vld [vmem:[#allocation2 + $0x28] sm:$0xff]
    %v33 = vld [vmem:[#allocation2 + $0x30] sm:$0xff]
    %v34 = vld [vmem:[#allocation2 + $0x38] sm:$0xff]
    %v35 = vld [vmem:[#allocation2 + $0x40] sm:$0xff]
    %v36 = vld [vmem:[#allocation2 + $0x48] sm:$0xff]
    %v37 = vld [vmem:[#allocation2 + $0x50] sm:$0xff]
    %v38 = vld [vmem:[#allocation2 + $0x58] sm:$0xff]
    %v39 = vld [vmem:[#allocation2 + $0x60] sm:$0xff]
    %v40 = vld [vmem:[#allocation2 + $0x68] sm:$0xff]
    %v41 = vld [vmem:[#allocation2 + $0x70] sm:$0xff]
    %v42 = vld [vmem:[#allocation2 + $0x78] sm:$0xff]
    %44 = vset.pattern.permute.xlu0 32
    %45 = vperm.xlu0 %44, %v26
    %v46 = vpop.permute.xlu0 %45
    %vm48 = vcmask 130048
    %v49 = vsel %vm48, %v26, 0
    %51 = vmatprep.subr.mxu0 0.0
    %52 = vmatpush1.msra.mxu0 %v27
    %53 = vmatprep.subr.mxu0 0.0
    %54 = vmatpush1.msra.mxu0 %v28
    %55 = vmatprep.subr.mxu0 0.0
    %56 = vmatpush1.msra.mxu0 0.0
    %57 = vmatprep.subr.mxu0 0.0
    %58 = vmatpush1.msra.mxu0 0.0
    %59 = vmatprep.subr.mxu0 0.0
    %60 = vmatpush1.msra.mxu0 0.0
    %61 = vmatprep.subr.mxu0 0.0
    %62 = vmatpush1.msra.mxu0 0.0
    %63 = vmatprep.subr.mxu0 0.0
    %64 = vmatpush1.msra.mxu0 0.0
    %65 = vmatprep.subr.mxu0 0.0
    %66 = vmatpush1.msra.mxu0 0.0
    %67 = vmatprep.subr.mxu0 0.0
    %68 = vmatpush1.msra.mxu0 0.0
    %69 = vmatprep.subr.mxu0 0.0
    %70 = vmatpush1.msra.mxu0 0.0
    %71 = vmatprep.subr.mxu0 0.0
    %72 = vmatpush1.msra.mxu0 0.0
    %73 = vmatprep.subr.mxu0 0.0
    %74 = vmatpush1.msra.mxu0 0.0
    %75 = vmatprep.subr.mxu0 0.0
    %76 = vmatpush1.msra.mxu0 0.0
    %77 = vmatprep.subr.mxu0 0.0
    %78 = vmatpush1.msra.mxu0 0.0
    %79 = vmatprep.subr.mxu0 0.0
    %80 = vmatpush1.msra.mxu0 0.0
    %81 = vmatprep.subr.mxu0 0.0
    %82 = vmatpush1.msra.mxu0 0.0
    %83 = vmatprep.subr.mxu0 0.0
    %84 = vmatpush1.msra.mxu0 0.0
    %85 = vmatprep.subr.mxu0 0.0
    %86 = vmatpush1.msra.mxu0 0.0
    %87 = vmatprep.subr.mxu0 0.0
    %88 = vmatpush1.msra.mxu0 0.0
    %89 = vmatprep.subr.mxu0 0.0
    %90 = vmatpush1.msra.mxu0 0.0
    %91 = vmatprep.subr.mxu0 0.0
    %92 = vmatpush1.msra.mxu0 0.0
    %93 = vmatprep.subr.mxu0 0.0
    %94 = vmatpush1.msra.mxu0 0.0
    %95 = vmatprep.subr.mxu0 0.0
    %96 = vmatpush1.msra.mxu0 0.0
    %97 = vmatprep.subr.mxu0 0.0
    %98 = vmatpush1.msra.mxu0 0.0
    %99 = vmatprep.subr.mxu0 0.0
    %100 = vmatpush1.msra.mxu0 0.0
    %101 = vmatprep.subr.mxu0 0.0
    %102 = vmatpush1.msra.mxu0 0.0
    %103 = vmatprep.subr.mxu0 0.0
    %104 = vmatpush1.msra.mxu0 0.0
    %105 = vmatprep.subr.mxu0 0.0
    %106 = vmatpush1.msra.mxu0 0.0
    %107 = vmatprep.subr.mxu0 0.0
    %108 = vmatpush1.msra.mxu0 0.0
    %109 = vmatprep.subr.mxu0 0.0
    %110 = vmatpush1.msra.mxu0 0.0
    %111 = vmatprep.subr.mxu0 0.0
    %112 = vmatpush1.msra.mxu0 0.0
    %113 = vmatprep.subr.mxu0 0.0
    %114 = vmatpush1.msra.mxu0 0.0
    %115 = vmatprep.mubr.f32.mxu0 0.0
    %116 = vmatmul.mubr.f32.gmra.mrb[0].mxu0 %v49
    %v117 = vpop.f32.mrb[0].mxu0
    %v118 = vadd.f32 %v46, %v117
    %v119 = vpop.f32.mrb[0].mxu0
    %120 = vdwg.mxu0
    %121 = vmatprep.subr.mxu0 0.0
    %122 = vmatpush1.msra.mxu0 %v29
    %123 = vmatprep.subr.mxu0 0.0
    %124 = vmatpush1.msra.mxu0 %v30
    %125 = vmatprep.subr.mxu0 0.0
    %126 = vmatpush1.msra.mxu0 0.0
    %127 = vmatprep.subr.mxu0 0.0
    %128 = vmatpush1.msra.mxu0 0.0
    %129 = vmatprep.subr.mxu0 0.0
    %130 = vmatpush1.msra.mxu0 0.0
    %131 = vmatprep.subr.mxu0 0.0
    %132 = vmatpush1.msra.mxu0 0.0
    %133 = vmatprep.subr.mxu0 0.0
    %134 = vmatpush1.msra.mxu0 0.0
    %135 = vmatprep.subr.mxu0 0.0
    %136 = vmatpush1.msra.mxu0 0.0
    %137 = vmatprep.subr.mxu0 0.0
    %138 = vmatpush1.msra.mxu0 0.0
    %139 = vmatprep.subr.mxu0 0.0
    %140 = vmatpush1.msra.mxu0 0.0
    %141 = vmatprep.subr.mxu0 0.0
    %142 = vmatpush1.msra.mxu0 0.0
    %143 = vmatprep.subr.mxu0 0.0
    %144 = vmatpush1.msra.mxu0 0.0
    %145 = vmatprep.subr.mxu0 0.0
    %146 = vmatpush1.msra.mxu0 0.0
    %147 = vmatprep.subr.mxu0 0.0
    %148 = vmatpush1.msra.mxu0 0.0
    %149 = vmatprep.subr.mxu0 0.0
    %150 = vmatpush1.msra.mxu0 0.0
    %151 = vmatprep.subr.mxu0 0.0
    %152 = vmatpush1.msra.mxu0 0.0
    %153 = vmatprep.subr.mxu0 0.0
    %154 = vmatpush1.msra.mxu0 0.0
    %155 = vmatprep.subr.mxu0 0.0
    %156 = vmatpush1.msra.mxu0 0.0
    %157 = vmatprep.subr.mxu0 0.0
    %158 = vmatpush1.msra.mxu0 0.0
    %159 = vmatprep.subr.mxu0 0.0
    %160 = vmatpush1.msra.mxu0 0.0
    %161 = vmatprep.subr.mxu0 0.0
    %162 = vmatpush1.msra.mxu0 0.0
    %163 = vmatprep.subr.mxu0 0.0
    %164 = vmatpush1.msra.mxu0 0.0
    %165 = vmatprep.subr.mxu0 0.0
    %166 = vmatpush1.msra.mxu0 0.0
    %167 = vmatprep.subr.mxu0 0.0
    %168 = vmatpush1.msra.mxu0 0.0
    %169 = vmatprep.subr.mxu0 0.0
    %170 = vmatpush1.msra.mxu0 0.0
    %171 = vmatprep.subr.mxu0 0.0
    %172 = vmatpush1.msra.mxu0 0.0
    %173 = vmatprep.subr.mxu0 0.0
    %174 = vmatpush1.msra.mxu0 0.0
    %175 = vmatprep.subr.mxu0 0.0
    %176 = vmatpush1.msra.mxu0 0.0
    %177 = vmatprep.subr.mxu0 0.0
    %178 = vmatpush1.msra.mxu0 0.0
    %179 = vmatprep.subr.mxu0 0.0
    %180 = vmatpush1.msra.mxu0 0.0
    %181 = vmatprep.subr.mxu0 0.0
    %182 = vmatpush1.msra.mxu0 0.0
    %183 = vmatprep.subr.mxu0 0.0
    %184 = vmatpush1.msra.mxu0 0.0
    %185 = vmatprep.mubr.f32.mxu0 0.0
    %186 = vmatmul.mubr.f32.gmra.mrb[0].mxu0 %v49
    %v187 = vpop.f32.mrb[0].mxu0
    %v188 = vadd.f32 %v46, %v187
    %v189 = vpop.f32.mrb[0].mxu0
    %190 = vdwg.mxu0
    %191 = vmatprep.subr.mxu0 0.0
    %192 = vmatpush1.msra.mxu0 %v31
    %193 = vmatprep.subr.mxu0 0.0
    %194 = vmatpush1.msra.mxu0 %v32
    %195 = vmatprep.subr.mxu0 0.0
    %196 = vmatpush1.msra.mxu0 0.0
    %197 = vmatprep.subr.mxu0 0.0
    %198 = vmatpush1.msra.mxu0 0.0
    %199 = vmatprep.subr.mxu0 0.0
    %200 = vmatpush1.msra.mxu0 0.0
    %201 = vmatprep.subr.mxu0 0.0
    %202 = vmatpush1.msra.mxu0 0.0
    %203 = vmatprep.subr.mxu0 0.0
    %204 = vmatpush1.msra.mxu0 0.0
    %205 = vmatprep.subr.mxu0 0.0
    %206 = vmatpush1.msra.mxu0 0.0
    %207 = vmatprep.subr.mxu0 0.0
    %208 = vmatpush1.msra.mxu0 0.0
    %209 = vmatprep.subr.mxu0 0.0
    %210 = vmatpush1.msra.mxu0 0.0
    %211 = vmatprep.subr.mxu0 0.0
    %212 = vmatpush1.msra.mxu0 0.0
    %213 = vmatprep.subr.mxu0 0.0
    %214 = vmatpush1.msra.mxu0 0.0
    %215 = vmatprep.subr.mxu0 0.0
    %216 = vmatpush1.msra.mxu0 0.0
    %217 = vmatprep.subr.mxu0 0.0
    %218 = vmatpush1.msra.mxu0 0.0
    %219 = vmatprep.subr.mxu0 0.0
    %220 = vmatpush1.msra.mxu0 0.0
    %221 = vmatprep.subr.mxu0 0.0
    %222 = vmatpush1.msra.mxu0 0.0
    %223 = vmatprep.subr.mxu0 0.0
    %224 = vmatpush1.msra.mxu0 0.0
    %225 = vmatprep.subr.mxu0 0.0
    %226 = vmatpush1.msra.mxu0 0.0
    %227 = vmatprep.subr.mxu0 0.0
    %228 = vmatpush1.msra.mxu0 0.0
    %229 = vmatprep.subr.mxu0 0.0
    %230 = vmatpush1.msra.mxu0 0.0
    %231 = vmatprep.subr.mxu0 0.0
    %232 = vmatpush1.msra.mxu0 0.0
    %233 = vmatprep.subr.mxu0 0.0
    %234 = vmatpush1.msra.mxu0 0.0
    %235 = vmatprep.subr.mxu0 0.0
    %236 = vmatpush1.msra.mxu0 0.0
    %237 = vmatprep.subr.mxu0 0.0
    %238 = vmatpush1.msra.mxu0 0.0
    %239 = vmatprep.subr.mxu0 0.0
    %240 = vmatpush1.msra.mxu0 0.0
    %241 = vmatprep.subr.mxu0 0.0
    %242 = vmatpush1.msra.mxu0 0.0
    %243 = vmatprep.subr.mxu0 0.0
    %244 = vmatpush1.msra.mxu0 0.0
    %245 = vmatprep.subr.mxu0 0.0
    %246 = vmatpush1.msra.mxu0 0.0
    %247 = vmatprep.subr.mxu0 0.0
    %248 = vmatpush1.msra.mxu0 0.0
    %249 = vmatprep.subr.mxu0 0.0
    %250 = vmatpush1.msra.mxu0 0.0
    %251 = vmatprep.subr.mxu0 0.0
    %252 = vmatpush1.msra.mxu0 0.0
    %253 = vmatprep.subr.mxu0 0.0
    %254 = vmatpush1.msra.mxu0 0.0
    %255 = vmatprep.mubr.f32.mxu0 0.0
    %256 = vmatmul.mubr.f32.gmra.mrb[0].mxu0 %v49
    %v257 = vpop.f32.mrb[0].mxu0
    %v258 = vadd.f32 %v46, %v257
    %v259 = vpop.f32.mrb[0].mxu0
    %260 = vdwg.mxu0
    %261 = vmatprep.subr.mxu0 0.0
    %262 = vmatpush1.msra.mxu0 %v33
    %263 = vmatprep.subr.mxu0 0.0
    %264 = vmatpush1.msra.mxu0 %v34
    %265 = vmatprep.subr.mxu0 0.0
    %266 = vmatpush1.msra.mxu0 0.0
    %267 = vmatprep.subr.mxu0 0.0
    %268 = vmatpush1.msra.mxu0 0.0
    %269 = vmatprep.subr.mxu0 0.0
    %270 = vmatpush1.msra.mxu0 0.0
    %271 = vmatprep.subr.mxu0 0.0
    %272 = vmatpush1.msra.mxu0 0.0
    %273 = vmatprep.subr.mxu0 0.0
    %274 = vmatpush1.msra.mxu0 0.0
    %275 = vmatprep.subr.mxu0 0.0
    %276 = vmatpush1.msra.mxu0 0.0
    %277 = vmatprep.subr.mxu0 0.0
    %278 = vmatpush1.msra.mxu0 0.0
    %279 = vmatprep.subr.mxu0 0.0
    %280 = vmatpush1.msra.mxu0 0.0
    %281 = vmatprep.subr.mxu0 0.0
    %282 = vmatpush1.msra.mxu0 0.0
    %283 = vmatprep.subr.mxu0 0.0
    %284 = vmatpush1.msra.mxu0 0.0
    %285 = vmatprep.subr.mxu0 0.0
    %286 = vmatpush1.msra.mxu0 0.0
    %287 = vmatprep.subr.mxu0 0.0
    %288 = vmatpush1.msra.mxu0 0.0
    %289 = vmatprep.subr.mxu0 0.0
    %290 = vmatpush1.msra.mxu0 0.0
    %291 = vmatprep.subr.mxu0 0.0
    %292 = vmatpush1.msra.mxu0 0.0
    %293 = vmatprep.subr.mxu0 0.0
    %294 = vmatpush1.msra.mxu0 0.0
    %295 = vmatprep.subr.mxu0 0.0
    %296 = vmatpush1.msra.mxu0 0.0
    %297 = vmatprep.subr.mxu0 0.0
    %298 = vmatpush1.msra.mxu0 0.0
    %299 = vmatprep.subr.mxu0 0.0
    %300 = vmatpush1.msra.mxu0 0.0
    %301 = vmatprep.subr.mxu0 0.0
    %302 = vmatpush1.msra.mxu0 0.0
    %303 = vmatprep.subr.mxu0 0.0
    %304 = vmatpush1.msra.mxu0 0.0
    %305 = vmatprep.subr.mxu0 0.0
    %306 = vmatpush1.msra.mxu0 0.0
    %307 = vmatprep.subr.mxu0 0.0
    %308 = vmatpush1.msra.mxu0 0.0
    %309 = vmatprep.subr.mxu0 0.0
    %310 = vmatpush1.msra.mxu0 0.0
    %311 = vmatprep.subr.mxu0 0.0
    %312 = vmatpush1.msra.mxu0 0.0
    %313 = vmatprep.subr.mxu0 0.0
    %314 = vmatpush1.msra.mxu0 0.0
    %315 = vmatprep.subr.mxu0 0.0
    %316 = vmatpush1.msra.mxu0 0.0
    %317 = vmatprep.subr.mxu0 0.0
    %318 = vmatpush1.msra.mxu0 0.0
    %319 = vmatprep.subr.mxu0 0.0
    %320 = vmatpush1.msra.mxu0 0.0
    %321 = vmatprep.subr.mxu0 0.0
    %322 = vmatpush1.msra.mxu0 0.0
    %323 = vmatprep.subr.mxu0 0.0
    %324 = vmatpush1.msra.mxu0 0.0
    %325 = vmatprep.mubr.f32.mxu0 0.0
    %326 = vmatmul.mubr.f32.gmra.mrb[0].mxu0 %v49
    %v327 = vpop.f32.mrb[0].mxu0
    %v328 = vadd.f32 %v46, %v327
    %v329 = vpop.f32.mrb[0].mxu0
    %330 = vdwg.mxu0
    %331 = vmatprep.subr.mxu0 0.0
    %332 = vmatpush1.msra.mxu0 %v35
    %333 = vmatprep.subr.mxu0 0.0
    %334 = vmatpush1.msra.mxu0 %v36
    %335 = vmatprep.subr.mxu0 0.0
    %336 = vmatpush1.msra.mxu0 0.0
    %337 = vmatprep.subr.mxu0 0.0
    %338 = vmatpush1.msra.mxu0 0.0
    %339 = vmatprep.subr.mxu0 0.0
    %340 = vmatpush1.msra.mxu0 0.0
    %341 = vmatprep.subr.mxu0 0.0
    %342 = vmatpush1.msra.mxu0 0.0
    %343 = vmatprep.subr.mxu0 0.0
    %344 = vmatpush1.msra.mxu0 0.0
    %345 = vmatprep.subr.mxu0 0.0
    %346 = vmatpush1.msra.mxu0 0.0
    %347 = vmatprep.subr.mxu0 0.0
    %348 = vmatpush1.msra.mxu0 0.0
    %349 = vmatprep.subr.mxu0 0.0
    %350 = vmatpush1.msra.mxu0 0.0
    %351 = vmatprep.subr.mxu0 0.0
    %352 = vmatpush1.msra.mxu0 0.0
    %353 = vmatprep.subr.mxu0 0.0
    %354 = vmatpush1.msra.mxu0 0.0
    %355 = vmatprep.subr.mxu0 0.0
    %356 = vmatpush1.msra.mxu0 0.0
    %357 = vmatprep.subr.mxu0 0.0
    %358 = vmatpush1.msra.mxu0 0.0
    %359 = vmatprep.subr.mxu0 0.0
    %360 = vmatpush1.msra.mxu0 0.0
    %361 = vmatprep.subr.mxu0 0.0
    %362 = vmatpush1.msra.mxu0 0.0
    %363 = vmatprep.subr.mxu0 0.0
    %364 = vmatpush1.msra.mxu0 0.0
    %365 = vmatprep.subr.mxu0 0.0
    %366 = vmatpush1.msra.mxu0 0.0
    %367 = vmatprep.subr.mxu0 0.0
    %368 = vmatpush1.msra.mxu0 0.0
    %369 = vmatprep.subr.mxu0 0.0
    %370 = vmatpush1.msra.mxu0 0.0
    %371 = vmatprep.subr.mxu0 0.0
    %372 = vmatpush1.msra.mxu0 0.0
    %373 = vmatprep.subr.mxu0 0.0
    %374 = vmatpush1.msra.mxu0 0.0
    %375 = vmatprep.subr.mxu0 0.0
    %376 = vmatpush1.msra.mxu0 0.0
    %377 = vmatprep.subr.mxu0 0.0
    %378 = vmatpush1.msra.mxu0 0.0
    %379 = vmatprep.subr.mxu0 0.0
    %380 = vmatpush1.msra.mxu0 0.0
    %381 = vmatprep.subr.mxu0 0.0
    %382 = vmatpush1.msra.mxu0 0.0
    %383 = vmatprep.subr.mxu0 0.0
    %384 = vmatpush1.msra.mxu0 0.0
    %385 = vmatprep.subr.mxu0 0.0
    %386 = vmatpush1.msra.mxu0 0.0
    %387 = vmatprep.subr.mxu0 0.0
    %388 = vmatpush1.msra.mxu0 0.0
    %389 = vmatprep.subr.mxu0 0.0
    %390 = vmatpush1.msra.mxu0 0.0
    %391 = vmatprep.subr.mxu0 0.0
    %392 = vmatpush1.msra.mxu0 0.0
    %393 = vmatprep.subr.mxu0 0.0
    %394 = vmatpush1.msra.mxu0 0.0
    %395 = vmatprep.mubr.f32.mxu0 0.0
    %396 = vmatmul.mubr.f32.gmra.mrb[0].mxu0 %v49
    %v397 = vpop.f32.mrb[0].mxu0
    %v398 = vadd.f32 %v46, %v397
    %v399 = vpop.f32.mrb[0].mxu0
    %400 = vdwg.mxu0
    %401 = vmatprep.subr.mxu0 0.0
    %402 = vmatpush1.msra.mxu0 %v37
    %403 = vmatprep.subr.mxu0 0.0
    %404 = vmatpush1.msra.mxu0 %v38
    %405 = vmatprep.subr.mxu0 0.0
    %406 = vmatpush1.msra.mxu0 0.0
    %407 = vmatprep.subr.mxu0 0.0
    %408 = vmatpush1.msra.mxu0 0.0
    %409 = vmatprep.subr.mxu0 0.0
    %410 = vmatpush1.msra.mxu0 0.0
    %411 = vmatprep.subr.mxu0 0.0
    %412 = vmatpush1.msra.mxu0 0.0
    %413 = vmatprep.subr.mxu0 0.0
    %414 = vmatpush1.msra.mxu0 0.0
    %415 = vmatprep.subr.mxu0 0.0
    %416 = vmatpush1.msra.mxu0 0.0
    %417 = vmatprep.subr.mxu0 0.0
    %418 = vmatpush1.msra.mxu0 0.0
    %419 = vmatprep.subr.mxu0 0.0
    %420 = vmatpush1.msra.mxu0 0.0
    %421 = vmatprep.subr.mxu0 0.0
    %422 = vmatpush1.msra.mxu0 0.0
    %423 = vmatprep.subr.mxu0 0.0
    %424 = vmatpush1.msra.mxu0 0.0
    %425 = vmatprep.subr.mxu0 0.0
    %426 = vmatpush1.msra.mxu0 0.0
    %427 = vmatprep.subr.mxu0 0.0
    %428 = vmatpush1.msra.mxu0 0.0
    %429 = vmatprep.subr.mxu0 0.0
    %430 = vmatpush1.msra.mxu0 0.0
    %431 = vmatprep.subr.mxu0 0.0
    %432 = vmatpush1.msra.mxu0 0.0
    %433 = vmatprep.subr.mxu0 0.0
    %434 = vmatpush1.msra.mxu0 0.0
    %435 = vmatprep.subr.mxu0 0.0
    %436 = vmatpush1.msra.mxu0 0.0
    %437 = vmatprep.subr.mxu0 0.0
    %438 = vmatpush1.msra.mxu0 0.0
    %439 = vmatprep.subr.mxu0 0.0
    %440 = vmatpush1.msra.mxu0 0.0
    %441 = vmatprep.subr.mxu0 0.0
    %442 = vmatpush1.msra.mxu0 0.0
    %443 = vmatprep.subr.mxu0 0.0
    %444 = vmatpush1.msra.mxu0 0.0
    %445 = vmatprep.subr.mxu0 0.0
    %446 = vmatpush1.msra.mxu0 0.0
    %447 = vmatprep.subr.mxu0 0.0
    %448 = vmatpush1.msra.mxu0 0.0
    %449 = vmatprep.subr.mxu0 0.0
    %450 = vmatpush1.msra.mxu0 0.0
    %451 = vmatprep.subr.mxu0 0.0
    %452 = vmatpush1.msra.mxu0 0.0
    %453 = vmatprep.subr.mxu0 0.0
    %454 = vmatpush1.msra.mxu0 0.0
    %455 = vmatprep.subr.mxu0 0.0
    %456 = vmatpush1.msra.mxu0 0.0
    %457 = vmatprep.subr.mxu0 0.0
    %458 = vmatpush1.msra.mxu0 0.0
    %459 = vmatprep.subr.mxu0 0.0
    %460 = vmatpush1.msra.mxu0 0.0
    %461 = vmatprep.subr.mxu0 0.0
    %462 = vmatpush1.msra.mxu0 0.0
    %463 = vmatprep.subr.mxu0 0.0
    %464 = vmatpush1.msra.mxu0 0.0
    %465 = vmatprep.mubr.f32.mxu0 0.0
    %466 = vmatmul.mubr.f32.gmra.mrb[0].mxu0 %v49
    %v467 = vpop.f32.mrb[0].mxu0
    %v468 = vadd.f32 %v46, %v467
    %v469 = vpop.f32.mrb[0].mxu0
    %470 = vdwg.mxu0
    %471 = vmatprep.subr.mxu0 0.0
    %472 = vmatpush1.msra.mxu0 %v39
    %473 = vmatprep.subr.mxu0 0.0
    %474 = vmatpush1.msra.mxu0 %v40
    %475 = vmatprep.subr.mxu0 0.0
    %476 = vmatpush1.msra.mxu0 0.0
    %477 = vmatprep.subr.mxu0 0.0
    %478 = vmatpush1.msra.mxu0 0.0
    %479 = vmatprep.subr.mxu0 0.0
    %480 = vmatpush1.msra.mxu0 0.0
    %481 = vmatprep.subr.mxu0 0.0
    %482 = vmatpush1.msra.mxu0 0.0
    %483 = vmatprep.subr.mxu0 0.0
    %484 = vmatpush1.msra.mxu0 0.0
    %485 = vmatprep.subr.mxu0 0.0
    %486 = vmatpush1.msra.mxu0 0.0
    %487 = vmatprep.subr.mxu0 0.0
    %488 = vmatpush1.msra.mxu0 0.0
    %489 = vmatprep.subr.mxu0 0.0
    %490 = vmatpush1.msra.mxu0 0.0
    %491 = vmatprep.subr.mxu0 0.0
    %492 = vmatpush1.msra.mxu0 0.0
    %493 = vmatprep.subr.mxu0 0.0
    %494 = vmatpush1.msra.mxu0 0.0
    %495 = vmatprep.subr.mxu0 0.0
    %496 = vmatpush1.msra.mxu0 0.0
    %497 = vmatprep.subr.mxu0 0.0
    %498 = vmatpush1.msra.mxu0 0.0
    %499 = vmatprep.subr.mxu0 0.0
    %500 = vmatpush1.msra.mxu0 0.0
    %501 = vmatprep.subr.mxu0 0.0
    %502 = vmatpush1.msra.mxu0 0.0
    %503 = vmatprep.subr.mxu0 0.0
    %504 = vmatpush1.msra.mxu0 0.0
    %505 = vmatprep.subr.mxu0 0.0
    %506 = vmatpush1.msra.mxu0 0.0
    %507 = vmatprep.subr.mxu0 0.0
    %508 = vmatpush1.msra.mxu0 0.0
    %509 = vmatprep.subr.mxu0 0.0
    %510 = vmatpush1.msra.mxu0 0.0
    %511 = vmatprep.subr.mxu0 0.0
    %512 = vmatpush1.msra.mxu0 0.0
    %513 = vmatprep.subr.mxu0 0.0
    %514 = vmatpush1.msra.mxu0 0.0
    %515 = vmatprep.subr.mxu0 0.0
    %516 = vmatpush1.msra.mxu0 0.0
    %517 = vmatprep.subr.mxu0 0.0
    %518 = vmatpush1.msra.mxu0 0.0
    %519 = vmatprep.subr.mxu0 0.0
    %520 = vmatpush1.msra.mxu0 0.0
    %521 = vmatprep.subr.mxu0 0.0
    %522 = vmatpush1.msra.mxu0 0.0
    %523 = vmatprep.subr.mxu0 0.0
    %524 = vmatpush1.msra.mxu0 0.0
    %525 = vmatprep.subr.mxu0 0.0
    %526 = vmatpush1.msra.mxu0 0.0
    %527 = vmatprep.subr.mxu0 0.0
    %528 = vmatpush1.msra.mxu0 0.0
    %529 = vmatprep.subr.mxu0 0.0
    %530 = vmatpush1.msra.mxu0 0.0
    %531 = vmatprep.subr.mxu0 0.0
    %532 = vmatpush1.msra.mxu0 0.0
    %533 = vmatprep.subr.mxu0 0.0
    %534 = vmatpush1.msra.mxu0 0.0
    %535 = vmatprep.mubr.f32.mxu0 0.0
    %536 = vmatmul.mubr.f32.gmra.mrb[0].mxu0 %v49
    %v537 = vpop.f32.mrb[0].mxu0
    %v538 = vadd.f32 %v46, %v537
    %v539 = vpop.f32.mrb[0].mxu0
    %540 = vdwg.mxu0
    %541 = vmatprep.subr.mxu0 0.0
    %542 = vmatpush1.msra.mxu0 %v41
    %543 = vmatprep.subr.mxu0 0.0
    %544 = vmatpush1.msra.mxu0 %v42
    %545 = vmatprep.subr.mxu0 0.0
    %546 = vmatpush1.msra.mxu0 0.0
    %547 = vmatprep.subr.mxu0 0.0
    %548 = vmatpush1.msra.mxu0 0.0
    %549 = vmatprep.subr.mxu0 0.0
    %550 = vmatpush1.msra.mxu0 0.0
    %551 = vmatprep.subr.mxu0 0.0
    %552 = vmatpush1.msra.mxu0 0.0
    %553 = vmatprep.subr.mxu0 0.0
    %554 = vmatpush1.msra.mxu0 0.0
    %555 = vmatprep.subr.mxu0 0.0
    %556 = vmatpush1.msra.mxu0 0.0
    %557 = vmatprep.subr.mxu0 0.0
    %558 = vmatpush1.msra.mxu0 0.0
    %559 = vmatprep.subr.mxu0 0.0
    %560 = vmatpush1.msra.mxu0 0.0
    %561 = vmatprep.subr.mxu0 0.0
    %562 = vmatpush1.msra.mxu0 0.0
    %563 = vmatprep.subr.mxu0 0.0
    %564 = vmatpush1.msra.mxu0 0.0
    %565 = vmatprep.subr.mxu0 0.0
    %566 = vmatpush1.msra.mxu0 0.0
    %567 = vmatprep.subr.mxu0 0.0
    %568 = vmatpush1.msra.mxu0 0.0
    %569 = vmatprep.subr.mxu0 0.0
    %570 = vmatpush1.msra.mxu0 0.0
    %571 = vmatprep.subr.mxu0 0.0
    %572 = vmatpush1.msra.mxu0 0.0
    %573 = vmatprep.subr.mxu0 0.0
    %574 = vmatpush1.msra.mxu0 0.0
    %575 = vmatprep.subr.mxu0 0.0
    %576 = vmatpush1.msra.mxu0 0.0
    %577 = vmatprep.subr.mxu0 0.0
    %578 = vmatpush1.msra.mxu0 0.0
    %579 = vmatprep.subr.mxu0 0.0
    %580 = vmatpush1.msra.mxu0 0.0
    %581 = vmatprep.subr.mxu0 0.0
    %582 = vmatpush1.msra.mxu0 0.0
    %583 = vmatprep.subr.mxu0 0.0
    %584 = vmatpush1.msra.mxu0 0.0
    %585 = vmatprep.subr.mxu0 0.0
    %586 = vmatpush1.msra.mxu0 0.0
    %587 = vmatprep.subr.mxu0 0.0
    %588 = vmatpush1.msra.mxu0 0.0
    %589 = vmatprep.subr.mxu0 0.0
    %590 = vmatpush1.msra.mxu0 0.0
    %591 = vmatprep.subr.mxu0 0.0
    %592 = vmatpush1.msra.mxu0 0.0
    %593 = vmatprep.subr.mxu0 0.0
    %594 = vmatpush1.msra.mxu0 0.0
    %595 = vmatprep.subr.mxu0 0.0
    %596 = vmatpush1.msra.mxu0 0.0
    %597 = vmatprep.subr.mxu0 0.0
    %598 = vmatpush1.msra.mxu0 0.0
    %599 = vmatprep.subr.mxu0 0.0
    %600 = vmatpush1.msra.mxu0 0.0
    %601 = vmatprep.subr.mxu0 0.0
    %602 = vmatpush1.msra.mxu0 0.0
    %603 = vmatprep.subr.mxu0 0.0
    %604 = vmatpush1.msra.mxu0 0.0
    %605 = vmatprep.mubr.f32.mxu0 0.0
    %606 = vmatmul.mubr.f32.gmra.mrb[0].mxu0 %v49
    %v607 = vpop.f32.mrb[0].mxu0
    %v608 = vadd.f32 %v46, %v607
    %v609 = vpop.f32.mrb[0].mxu0
    %610 = vdwg.mxu0
    %611 = vset.pattern.permute.xlu0 33
    %612 = vperm.xlu0 %611, %v26
    %v613 = vpop.permute.xlu0 %612
    %615 = vrot.lane.b32.xlu0 %v26, 112
    %v616 = vpop.permute.xlu0 %615
    %v617 = vsel %vm48, %v616, 0
    %v620 = vsel %vm48, %v27, 0
    %v623 = vsel %vm48, %v28, 0
    %625 = vmatprep.subr.mxu0 0.0
    %626 = vmatpush1.xpose.msra.mxu0 %v620
    %627 = vmatprep.subr.mxu0 0.0
    %628 = vmatpush1.xpose.msra.mxu0 %v623
    %629 = vmatprep.subr.mxu0 0.0
    %630 = vmatpush1.xpose.msra.mxu0 0.0
    %631 = vmatprep.subr.mxu0 0.0
    %632 = vmatpush1.xpose.msra.mxu0 0.0
    %633 = vmatprep.subr.mxu0 0.0
    %634 = vmatpush1.xpose.msra.mxu0 0.0
    %635 = vmatprep.subr.mxu0 0.0
    %636 = vmatpush1.xpose.msra.mxu0 0.0
    %637 = vmatprep.subr.mxu0 0.0
    %638 = vmatpush1.xpose.msra.mxu0 0.0
    %639 = vmatprep.subr.mxu0 0.0
    %640 = vmatpush1.xpose.msra.mxu0 0.0
    %641 = vmatprep.subr.mxu0 0.0
    %642 = vmatpush1.xpose.msra.mxu0 0.0
    %643 = vmatprep.subr.mxu0 0.0
    %644 = vmatpush1.xpose.msra.mxu0 0.0
    %645 = vmatprep.subr.mxu0 0.0
    %646 = vmatpush1.xpose.msra.mxu0 0.0
    %647 = vmatprep.subr.mxu0 0.0
    %648 = vmatpush1.xpose.msra.mxu0 0.0
    %649 = vmatprep.subr.mxu0 0.0
    %650 = vmatpush1.xpose.msra.mxu0 0.0
    %651 = vmatprep.subr.mxu0 0.0
    %652 = vmatpush1.xpose.msra.mxu0 0.0
    %653 = vmatprep.subr.mxu0 0.0
    %654 = vmatpush1.xpose.msra.mxu0 0.0
    %655 = vmatprep.subr.mxu0 0.0
    %656 = vmatpush1.xpose.msra.mxu0 0.0
    %657 = vmatprep.subr.mxu0 0.0
    %658 = vmatpush1.xpose.msra.mxu0 0.0
    %659 = vmatprep.subr.mxu0 0.0
    %660 = vmatpush1.xpose.msra.mxu0 0.0
    %661 = vmatprep.subr.mxu0 0.0
    %662 = vmatpush1.xpose.msra.mxu0 0.0
    %663 = vmatprep.subr.mxu0 0.0
    %664 = vmatpush1.xpose.msra.mxu0 0.0
    %665 = vmatprep.subr.mxu0 0.0
    %666 = vmatpush1.xpose.msra.mxu0 0.0
    %667 = vmatprep.subr.mxu0 0.0
    %668 = vmatpush1.xpose.msra.mxu0 0.0
    %669 = vmatprep.subr.mxu0 0.0
    %670 = vmatpush1.xpose.msra.mxu0 0.0
    %671 = vmatprep.subr.mxu0 0.0
    %672 = vmatpush1.xpose.msra.mxu0 0.0
    %673 = vmatprep.subr.mxu0 0.0
    %674 = vmatpush1.xpose.msra.mxu0 0.0
    %675 = vmatprep.subr.mxu0 0.0
    %676 = vmatpush1.xpose.msra.mxu0 0.0
    %677 = vmatprep.subr.mxu0 0.0
    %678 = vmatpush1.xpose.msra.mxu0 0.0
    %679 = vmatprep.subr.mxu0 0.0
    %680 = vmatpush1.xpose.msra.mxu0 0.0
    %681 = vmatprep.subr.mxu0 0.0
    %682 = vmatpush1.xpose.msra.mxu0 0.0
    %683 = vmatprep.subr.mxu0 0.0
    %684 = vmatpush1.xpose.msra.mxu0 0.0
    %685 = vmatprep.subr.mxu0 0.0
    %686 = vmatpush1.xpose.msra.mxu0 0.0
    %687 = vmatprep.subr.mxu0 0.0
    %688 = vmatpush1.xpose.msra.mxu0 0.0
    %689 = vmatprep.mubr.f32.mxu0 0.0
    %690 = vmatmul.mubr.f32.gmra.mrb[0].mxu0 %v617
    %v691 = vpop.f32.mrb[0].mxu0
    %v692 = vadd.f32 %v613, %v691
    %v693 = vpop.f32.mrb[0].mxu0
    %694 = vdwg.mxu0
    %v696 = vsel %vm48, %v29, 0
    %v699 = vsel %vm48, %v30, 0
    %701 = vmatprep.subr.mxu0 0.0
    %702 = vmatpush1.xpose.msra.mxu0 %v696
    %703 = vmatprep.subr.mxu0 0.0
    %704 = vmatpush1.xpose.msra.mxu0 %v699
    %705 = vmatprep.subr.mxu0 0.0
    %706 = vmatpush1.xpose.msra.mxu0 0.0
    %707 = vmatprep.subr.mxu0 0.0
    %708 = vmatpush1.xpose.msra.mxu0 0.0
    %709 = vmatprep.subr.mxu0 0.0
    %710 = vmatpush1.xpose.msra.mxu0 0.0
    %711 = vmatprep.subr.mxu0 0.0
    %712 = vmatpush1.xpose.msra.mxu0 0.0
    %713 = vmatprep.subr.mxu0 0.0
    %714 = vmatpush1.xpose.msra.mxu0 0.0
    %715 = vmatprep.subr.mxu0 0.0
    %716 = vmatpush1.xpose.msra.mxu0 0.0
    %717 = vmatprep.subr.mxu0 0.0
    %718 = vmatpush1.xpose.msra.mxu0 0.0
    %719 = vmatprep.subr.mxu0 0.0
    %720 = vmatpush1.xpose.msra.mxu0 0.0
    %721 = vmatprep.subr.mxu0 0.0
    %722 = vmatpush1.xpose.msra.mxu0 0.0
    %723 = vmatprep.subr.mxu0 0.0
    %724 = vmatpush1.xpose.msra.mxu0 0.0
    %725 = vmatprep.subr.mxu0 0.0
    %726 = vmatpush1.xpose.msra.mxu0 0.0
    %727 = vmatprep.subr.mxu0 0.0
    %728 = vmatpush1.xpose.msra.mxu0 0.0
    %729 = vmatprep.subr.mxu0 0.0
    %730 = vmatpush1.xpose.msra.mxu0 0.0
    %731 = vmatprep.subr.mxu0 0.0
    %732 = vmatpush1.xpose.msra.mxu0 0.0
    %733 = vmatprep.subr.mxu0 0.0
    %734 = vmatpush1.xpose.msra.mxu0 0.0
    %735 = vmatprep.subr.mxu0 0.0
    %736 = vmatpush1.xpose.msra.mxu0 0.0
    %737 = vmatprep.subr.mxu0 0.0
    %738 = vmatpush1.xpose.msra.mxu0 0.0
    %739 = vmatprep.subr.mxu0 0.0
    %740 = vmatpush1.xpose.msra.mxu0 0.0
    %741 = vmatprep.subr.mxu0 0.0
    %742 = vmatpush1.xpose.msra.mxu0 0.0
    %743 = vmatprep.subr.mxu0 0.0
    %744 = vmatpush1.xpose.msra.mxu0 0.0
    %745 = vmatprep.subr.mxu0 0.0
    %746 = vmatpush1.xpose.msra.mxu0 0.0
    %747 = vmatprep.subr.mxu0 0.0
    %748 = vmatpush1.xpose.msra.mxu0 0.0
    %749 = vmatprep.subr.mxu0 0.0
    %750 = vmatpush1.xpose.msra.mxu0 0.0
    %751 = vmatprep.subr.mxu0 0.0
    %752 = vmatpush1.xpose.msra.mxu0 0.0
    %753 = vmatprep.subr.mxu0 0.0
    %754 = vmatpush1.xpose.msra.mxu0 0.0
    %755 = vmatprep.subr.mxu0 0.0
    %756 = vmatpush1.xpose.msra.mxu0 0.0
    %757 = vmatprep.subr.mxu0 0.0
    %758 = vmatpush1.xpose.msra.mxu0 0.0
    %759 = vmatprep.subr.mxu0 0.0
    %760 = vmatpush1.xpose.msra.mxu0 0.0
    %761 = vmatprep.subr.mxu0 0.0
    %762 = vmatpush1.xpose.msra.mxu0 0.0
    %763 = vmatprep.subr.mxu0 0.0
    %764 = vmatpush1.xpose.msra.mxu0 0.0
    %765 = vmatprep.mubr.f32.mxu0 0.0
    %766 = vmatmul.mubr.f32.gmra.mrb[0].mxu0 %v617
    %v767 = vpop.f32.mrb[0].mxu0
    %v768 = vadd.f32 %v613, %v767
    %v769 = vpop.f32.mrb[0].mxu0
    %770 = vdwg.mxu0
    %v772 = vsel %vm48, %v31, 0
    %v775 = vsel %vm48, %v32, 0
    %777 = vmatprep.subr.mxu0 0.0
    %778 = vmatpush1.xpose.msra.mxu0 %v772
    %779 = vmatprep.subr.mxu0 0.0
    %780 = vmatpush1.xpose.msra.mxu0 %v775
    %781 = vmatprep.subr.mxu0 0.0
    %782 = vmatpush1.xpose.msra.mxu0 0.0
    %783 = vmatprep.subr.mxu0 0.0
    %784 = vmatpush1.xpose.msra.mxu0 0.0
    %785 = vmatprep.subr.mxu0 0.0
    %786 = vmatpush1.xpose.msra.mxu0 0.0
    %787 = vmatprep.subr.mxu0 0.0
    %788 = vmatpush1.xpose.msra.mxu0 0.0
    %789 = vmatprep.subr.mxu0 0.0
    %790 = vmatpush1.xpose.msra.mxu0 0.0
    %791 = vmatprep.subr.mxu0 0.0
    %792 = vmatpush1.xpose.msra.mxu0 0.0
    %793 = vmatprep.subr.mxu0 0.0
    %794 = vmatpush1.xpose.msra.mxu0 0.0
    %795 = vmatprep.subr.mxu0 0.0
    %796 = vmatpush1.xpose.msra.mxu0 0.0
    %797 = vmatprep.subr.mxu0 0.0
    %798 = vmatpush1.xpose.msra.mxu0 0.0
    %799 = vmatprep.subr.mxu0 0.0
    %800 = vmatpush1.xpose.msra.mxu0 0.0
    %801 = vmatprep.subr.mxu0 0.0
    %802 = vmatpush1.xpose.msra.mxu0 0.0
    %803 = vmatprep.subr.mxu0 0.0
    %804 = vmatpush1.xpose.msra.mxu0 0.0
    %805 = vmatprep.subr.mxu0 0.0
    %806 = vmatpush1.xpose.msra.mxu0 0.0
    %807 = vmatprep.subr.mxu0 0.0
    %808 = vmatpush1.xpose.msra.mxu0 0.0
    %809 = vmatprep.subr.mxu0 0.0
    %810 = vmatpush1.xpose.msra.mxu0 0.0
    %811 = vmatprep.subr.mxu0 0.0
    %812 = vmatpush1.xpose.msra.mxu0 0.0
    %813 = vmatprep.subr.mxu0 0.0
    %814 = vmatpush1.xpose.msra.mxu0 0.0
    %815 = vmatprep.subr.mxu0 0.0
    %816 = vmatpush1.xpose.msra.mxu0 0.0
    %817 = vmatprep.subr.mxu0 0.0
    %818 = vmatpush1.xpose.msra.mxu0 0.0
    %819 = vmatprep.subr.mxu0 0.0
    %820 = vmatpush1.xpose.msra.mxu0 0.0
    %821 = vmatprep.subr.mxu0 0.0
    %822 = vmatpush1.xpose.msra.mxu0 0.0
    %823 = vmatprep.subr.mxu0 0.0
    %824 = vmatpush1.xpose.msra.mxu0 0.0
    %825 = vmatprep.subr.mxu0 0.0
    %826 = vmatpush1.xpose.msra.mxu0 0.0
    %827 = vmatprep.subr.mxu0 0.0
    %828 = vmatpush1.xpose.msra.mxu0 0.0
    %829 = vmatprep.subr.mxu0 0.0
    %830 = vmatpush1.xpose.msra.mxu0 0.0
    %831 = vmatprep.subr.mxu0 0.0
    %832 = vmatpush1.xpose.msra.mxu0 0.0
    %833 = vmatprep.subr.mxu0 0.0
    %834 = vmatpush1.xpose.msra.mxu0 0.0
    %835 = vmatprep.subr.mxu0 0.0
    %836 = vmatpush1.xpose.msra.mxu0 0.0
    %837 = vmatprep.subr.mxu0 0.0
    %838 = vmatpush1.xpose.msra.mxu0 0.0
    %839 = vmatprep.subr.mxu0 0.0
    %840 = vmatpush1.xpose.msra.mxu0 0.0
    %841 = vmatprep.mubr.f32.mxu0 0.0
    %842 = vmatmul.mubr.f32.gmra.mrb[0].mxu0 %v617
    %v843 = vpop.f32.mrb[0].mxu0
    %v844 = vadd.f32 %v613, %v843
    %v845 = vpop.f32.mrb[0].mxu0
    %846 = vdwg.mxu0
    %v848 = vsel %vm48, %v33, 0
    %v851 = vsel %vm48, %v34, 0
    %853 = vmatprep.subr.mxu0 0.0
    %854 = vmatpush1.xpose.msra.mxu0 %v848
    %855 = vmatprep.subr.mxu0 0.0
    %856 = vmatpush1.xpose.msra.mxu0 %v851
    %857 = vmatprep.subr.mxu0 0.0
    %858 = vmatpush1.xpose.msra.mxu0 0.0
    %859 = vmatprep.subr.mxu0 0.0
    %860 = vmatpush1.xpose.msra.mxu0 0.0
    %861 = vmatprep.subr.mxu0 0.0
    %862 = vmatpush1.xpose.msra.mxu0 0.0
    %863 = vmatprep.subr.mxu0 0.0
    %864 = vmatpush1.xpose.msra.mxu0 0.0
    %865 = vmatprep.subr.mxu0 0.0
    %866 = vmatpush1.xpose.msra.mxu0 0.0
    %867 = vmatprep.subr.mxu0 0.0
    %868 = vmatpush1.xpose.msra.mxu0 0.0
    %869 = vmatprep.subr.mxu0 0.0
    %870 = vmatpush1.xpose.msra.mxu0 0.0
    %871 = vmatprep.subr.mxu0 0.0
    %872 = vmatpush1.xpose.msra.mxu0 0.0
    %873 = vmatprep.subr.mxu0 0.0
    %874 = vmatpush1.xpose.msra.mxu0 0.0
    %875 = vmatprep.subr.mxu0 0.0
    %876 = vmatpush1.xpose.msra.mxu0 0.0
    %877 = vmatprep.subr.mxu0 0.0
    %878 = vmatpush1.xpose.msra.mxu0 0.0
    %879 = vmatprep.subr.mxu0 0.0
    %880 = vmatpush1.xpose.msra.mxu0 0.0
    %881 = vmatprep.subr.mxu0 0.0
    %882 = vmatpush1.xpose.msra.mxu0 0.0
    %883 = vmatprep.subr.mxu0 0.0
    %884 = vmatpush1.xpose.msra.mxu0 0.0
    %885 = vmatprep.subr.mxu0 0.0
    %886 = vmatpush1.xpose.msra.mxu0 0.0
    %887 = vmatprep.subr.mxu0 0.0
    %888 = vmatpush1.xpose.msra.mxu0 0.0
    %889 = vmatprep.subr.mxu0 0.0
    %890 = vmatpush1.xpose.msra.mxu0 0.0
    %891 = vmatprep.subr.mxu0 0.0
    %892 = vmatpush1.xpose.msra.mxu0 0.0
    %893 = vmatprep.subr.mxu0 0.0
    %894 = vmatpush1.xpose.msra.mxu0 0.0
    %895 = vmatprep.subr.mxu0 0.0
    %896 = vmatpush1.xpose.msra.mxu0 0.0
    %897 = vmatprep.subr.mxu0 0.0
    %898 = vmatpush1.xpose.msra.mxu0 0.0
    %899 = vmatprep.subr.mxu0 0.0
    %900 = vmatpush1.xpose.msra.mxu0 0.0
    %901 = vmatprep.subr.mxu0 0.0
    %902 = vmatpush1.xpose.msra.mxu0 0.0
    %903 = vmatprep.subr.mxu0 0.0
    %904 = vmatpush1.xpose.msra.mxu0 0.0
    %905 = vmatprep.subr.mxu0 0.0
    %906 = vmatpush1.xpose.msra.mxu0 0.0
    %907 = vmatprep.subr.mxu0 0.0
    %908 = vmatpush1.xpose.msra.mxu0 0.0
    %909 = vmatprep.subr.mxu0 0.0
    %910 = vmatpush1.xpose.msra.mxu0 0.0
    %911 = vmatprep.subr.mxu0 0.0
    %912 = vmatpush1.xpose.msra.mxu0 0.0
    %913 = vmatprep.subr.mxu0 0.0
    %914 = vmatpush1.xpose.msra.mxu0 0.0
    %915 = vmatprep.subr.mxu0 0.0
    %916 = vmatpush1.xpose.msra.mxu0 0.0
    %917 = vmatprep.mubr.f32.mxu0 0.0
    %918 = vmatmul.mubr.f32.gmra.mrb[0].mxu0 %v617
    %v919 = vpop.f32.mrb[0].mxu0
    %v920 = vadd.f32 %v613, %v919
    %v921 = vpop.f32.mrb[0].mxu0
    %922 = vdwg.mxu0
    %v924 = vsel %vm48, %v35, 0
    %v927 = vsel %vm48, %v36, 0
    %929 = vmatprep.subr.mxu0 0.0
    %930 = vmatpush1.xpose.msra.mxu0 %v924
    %931 = vmatprep.subr.mxu0 0.0
    %932 = vmatpush1.xpose.msra.mxu0 %v927
    %933 = vmatprep.subr.mxu0 0.0
    %934 = vmatpush1.xpose.msra.mxu0 0.0
    %935 = vmatprep.subr.mxu0 0.0
    %936 = vmatpush1.xpose.msra.mxu0 0.0
    %937 = vmatprep.subr.mxu0 0.0
    %938 = vmatpush1.xpose.msra.mxu0 0.0
    %939 = vmatprep.subr.mxu0 0.0
    %940 = vmatpush1.xpose.msra.mxu0 0.0
    %941 = vmatprep.subr.mxu0 0.0
    %942 = vmatpush1.xpose.msra.mxu0 0.0
    %943 = vmatprep.subr.mxu0 0.0
    %944 = vmatpush1.xpose.msra.mxu0 0.0
    %945 = vmatprep.subr.mxu0 0.0
    %946 = vmatpush1.xpose.msra.mxu0 0.0
    %947 = vmatprep.subr.mxu0 0.0
    %948 = vmatpush1.xpose.msra.mxu0 0.0
    %949 = vmatprep.subr.mxu0 0.0
    %950 = vmatpush1.xpose.msra.mxu0 0.0
    %951 = vmatprep.subr.mxu0 0.0
    %952 = vmatpush1.xpose.msra.mxu0 0.0
    %953 = vmatprep.subr.mxu0 0.0
    %954 = vmatpush1.xpose.msra.mxu0 0.0
    %955 = vmatprep.subr.mxu0 0.0
    %956 = vmatpush1.xpose.msra.mxu0 0.0
    %957 = vmatprep.subr.mxu0 0.0
    %958 = vmatpush1.xpose.msra.mxu0 0.0
    %959 = vmatprep.subr.mxu0 0.0
    %960 = vmatpush1.xpose.msra.mxu0 0.0
    %961 = vmatprep.subr.mxu0 0.0
    %962 = vmatpush1.xpose.msra.mxu0 0.0
    %963 = vmatprep.subr.mxu0 0.0
    %964 = vmatpush1.xpose.msra.mxu0 0.0
    %965 = vmatprep.subr.mxu0 0.0
    %966 = vmatpush1.xpose.msra.mxu0 0.0
    %967 = vmatprep.subr.mxu0 0.0
    %968 = vmatpush1.xpose.msra.mxu0 0.0
    %969 = vmatprep.subr.mxu0 0.0
    %970 = vmatpush1.xpose.msra.mxu0 0.0
    %971 = vmatprep.subr.mxu0 0.0
    %972 = vmatpush1.xpose.msra.mxu0 0.0
    %973 = vmatprep.subr.mxu0 0.0
    %974 = vmatpush1.xpose.msra.mxu0 0.0
    %975 = vmatprep.subr.mxu0 0.0
    %976 = vmatpush1.xpose.msra.mxu0 0.0
    %977 = vmatprep.subr.mxu0 0.0
    %978 = vmatpush1.xpose.msra.mxu0 0.0
    %979 = vmatprep.subr.mxu0 0.0
    %980 = vmatpush1.xpose.msra.mxu0 0.0
    %981 = vmatprep.subr.mxu0 0.0
    %982 = vmatpush1.xpose.msra.mxu0 0.0
    %983 = vmatprep.subr.mxu0 0.0
    %984 = vmatpush1.xpose.msra.mxu0 0.0
    %985 = vmatprep.subr.mxu0 0.0
    %986 = vmatpush1.xpose.msra.mxu0 0.0
    %987 = vmatprep.subr.mxu0 0.0
    %988 = vmatpush1.xpose.msra.mxu0 0.0
    %989 = vmatprep.subr.mxu0 0.0
    %990 = vmatpush1.xpose.msra.mxu0 0.0
    %991 = vmatprep.subr.mxu0 0.0
    %992 = vmatpush1.xpose.msra.mxu0 0.0
    %993 = vmatprep.mubr.f32.mxu0 0.0
    %994 = vmatmul.mubr.f32.gmra.mrb[0].mxu0 %v617
    %v995 = vpop.f32.mrb[0].mxu0
    %v996 = vadd.f32 %v613, %v995
    %v997 = vpop.f32.mrb[0].mxu0
    %998 = vdwg.mxu0
    %v1000 = vsel %vm48, %v37, 0
    %v1003 = vsel %vm48, %v38, 0
    %1005 = vmatprep.subr.mxu0 0.0
    %1006 = vmatpush1.xpose.msra.mxu0 %v1000
    %1007 = vmatprep.subr.mxu0 0.0
    %1008 = vmatpush1.xpose.msra.mxu0 %v1003
    %1009 = vmatprep.subr.mxu0 0.0
    %1010 = vmatpush1.xpose.msra.mxu0 0.0
    %1011 = vmatprep.subr.mxu0 0.0
    %1012 = vmatpush1.xpose.msra.mxu0 0.0
    %1013 = vmatprep.subr.mxu0 0.0
    %1014 = vmatpush1.xpose.msra.mxu0 0.0
    %1015 = vmatprep.subr.mxu0 0.0
    %1016 = vmatpush1.xpose.msra.mxu0 0.0
    %1017 = vmatprep.subr.mxu0 0.0
    %1018 = vmatpush1.xpose.msra.mxu0 0.0
    %1019 = vmatprep.subr.mxu0 0.0
    %1020 = vmatpush1.xpose.msra.mxu0 0.0
    %1021 = vmatprep.subr.mxu0 0.0
    %1022 = vmatpush1.xpose.msra.mxu0 0.0
    %1023 = vmatprep.subr.mxu0 0.0
    %1024 = vmatpush1.xpose.msra.mxu0 0.0
    %1025 = vmatprep.subr.mxu0 0.0
    %1026 = vmatpush1.xpose.msra.mxu0 0.0
    %1027 = vmatprep.subr.mxu0 0.0
    %1028 = vmatpush1.xpose.msra.mxu0 0.0
    %1029 = vmatprep.subr.mxu0 0.0
    %1030 = vmatpush1.xpose.msra.mxu0 0.0
    %1031 = vmatprep.subr.mxu0 0.0
    %1032 = vmatpush1.xpose.msra.mxu0 0.0
    %1033 = vmatprep.subr.mxu0 0.0
    %1034 = vmatpush1.xpose.msra.mxu0 0.0
    %1035 = vmatprep.subr.mxu0 0.0
    %1036 = vmatpush1.xpose.msra.mxu0 0.0
    %1037 = vmatprep.subr.mxu0 0.0
    %1038 = vmatpush1.xpose.msra.mxu0 0.0
    %1039 = vmatprep.subr.mxu0 0.0
    %1040 = vmatpush1.xpose.msra.mxu0 0.0
    %1041 = vmatprep.subr.mxu0 0.0
    %1042 = vmatpush1.xpose.msra.mxu0 0.0
    %1043 = vmatprep.subr.mxu0 0.0
    %1044 = vmatpush1.xpose.msra.mxu0 0.0
    %1045 = vmatprep.subr.mxu0 0.0
    %1046 = vmatpush1.xpose.msra.mxu0 0.0
    %1047 = vmatprep.subr.mxu0 0.0
    %1048 = vmatpush1.xpose.msra.mxu0 0.0
    %1049 = vmatprep.subr.mxu0 0.0
    %1050 = vmatpush1.xpose.msra.mxu0 0.0
    %1051 = vmatprep.subr.mxu0 0.0
    %1052 = vmatpush1.xpose.msra.mxu0 0.0
    %1053 = vmatprep.subr.mxu0 0.0
    %1054 = vmatpush1.xpose.msra.mxu0 0.0
    %1055 = vmatprep.subr.mxu0 0.0
    %1056 = vmatpush1.xpose.msra.mxu0 0.0
    %1057 = vmatprep.subr.mxu0 0.0
    %1058 = vmatpush1.xpose.msra.mxu0 0.0
    %1059 = vmatprep.subr.mxu0 0.0
    %1060 = vmatpush1.xpose.msra.mxu0 0.0
    %1061 = vmatprep.subr.mxu0 0.0
    %1062 = vmatpush1.xpose.msra.mxu0 0.0
    %1063 = vmatprep.subr.mxu0 0.0
    %1064 = vmatpush1.xpose.msra.mxu0 0.0
    %1065 = vmatprep.subr.mxu0 0.0
    %1066 = vmatpush1.xpose.msra.mxu0 0.0
    %1067 = vmatprep.subr.mxu0 0.0
    %1068 = vmatpush1.xpose.msra.mxu0 0.0
    %1069 = vmatprep.mubr.f32.mxu0 0.0
    %1070 = vmatmul.mubr.f32.gmra.mrb[0].mxu0 %v617
    %v1071 = vpop.f32.mrb[0].mxu0
    %v1072 = vadd.f32 %v613, %v1071
    %v1073 = vpop.f32.mrb[0].mxu0
    %1074 = vdwg.mxu0
    %v1076 = vsel %vm48, %v39, 0
    %v1079 = vsel %vm48, %v40, 0
    %1081 = vmatprep.subr.mxu0 0.0
    %1082 = vmatpush1.xpose.msra.mxu0 %v1076
    %1083 = vmatprep.subr.mxu0 0.0
    %1084 = vmatpush1.xpose.msra.mxu0 %v1079
    %1085 = vmatprep.subr.mxu0 0.0
    %1086 = vmatpush1.xpose.msra.mxu0 0.0
    %1087 = vmatprep.subr.mxu0 0.0
    %1088 = vmatpush1.xpose.msra.mxu0 0.0
    %1089 = vmatprep.subr.mxu0 0.0
    %1090 = vmatpush1.xpose.msra.mxu0 0.0
    %1091 = vmatprep.subr.mxu0 0.0
    %1092 = vmatpush1.xpose.msra.mxu0 0.0
    %1093 = vmatprep.subr.mxu0 0.0
    %1094 = vmatpush1.xpose.msra.mxu0 0.0
    %1095 = vmatprep.subr.mxu0 0.0
    %1096 = vmatpush1.xpose.msra.mxu0 0.0
    %1097 = vmatprep.subr.mxu0 0.0
    %1098 = vmatpush1.xpose.msra.mxu0 0.0
    %1099 = vmatprep.subr.mxu0 0.0
    %1100 = vmatpush1.xpose.msra.mxu0 0.0
    %1101 = vmatprep.subr.mxu0 0.0
    %1102 = vmatpush1.xpose.msra.mxu0 0.0
    %1103 = vmatprep.subr.mxu0 0.0
    %1104 = vmatpush1.xpose.msra.mxu0 0.0
    %1105 = vmatprep.subr.mxu0 0.0
    %1106 = vmatpush1.xpose.msra.mxu0 0.0
    %1107 = vmatprep.subr.mxu0 0.0
    %1108 = vmatpush1.xpose.msra.mxu0 0.0
    %1109 = vmatprep.subr.mxu0 0.0
    %1110 = vmatpush1.xpose.msra.mxu0 0.0
    %1111 = vmatprep.subr.mxu0 0.0
    %1112 = vmatpush1.xpose.msra.mxu0 0.0
    %1113 = vmatprep.subr.mxu0 0.0
    %1114 = vmatpush1.xpose.msra.mxu0 0.0
    %1115 = vmatprep.subr.mxu0 0.0
    %1116 = vmatpush1.xpose.msra.mxu0 0.0
    %1117 = vmatprep.subr.mxu0 0.0
    %1118 = vmatpush1.xpose.msra.mxu0 0.0
    %1119 = vmatprep.subr.mxu0 0.0
    %1120 = vmatpush1.xpose.msra.mxu0 0.0
    %1121 = vmatprep.subr.mxu0 0.0
    %1122 = vmatpush1.xpose.msra.mxu0 0.0
    %1123 = vmatprep.subr.mxu0 0.0
    %1124 = vmatpush1.xpose.msra.mxu0 0.0
    %1125 = vmatprep.subr.mxu0 0.0
    %1126 = vmatpush1.xpose.msra.mxu0 0.0
    %1127 = vmatprep.subr.mxu0 0.0
    %1128 = vmatpush1.xpose.msra.mxu0 0.0
    %1129 = vmatprep.subr.mxu0 0.0
    %1130 = vmatpush1.xpose.msra.mxu0 0.0
    %1131 = vmatprep.subr.mxu0 0.0
    %1132 = vmatpush1.xpose.msra.mxu0 0.0
    %1133 = vmatprep.subr.mxu0 0.0
    %1134 = vmatpush1.xpose.msra.mxu0 0.0
    %1135 = vmatprep.subr.mxu0 0.0
    %1136 = vmatpush1.xpose.msra.mxu0 0.0
    %1137 = vmatprep.subr.mxu0 0.0
    %1138 = vmatpush1.xpose.msra.mxu0 0.0
    %1139 = vmatprep.subr.mxu0 0.0
    %1140 = vmatpush1.xpose.msra.mxu0 0.0
    %1141 = vmatprep.subr.mxu0 0.0
    %1142 = vmatpush1.xpose.msra.mxu0 0.0
    %1143 = vmatprep.subr.mxu0 0.0
    %1144 = vmatpush1.xpose.msra.mxu0 0.0
    %1145 = vmatprep.mubr.f32.mxu0 0.0
    %1146 = vmatmul.mubr.f32.gmra.mrb[0].mxu0 %v617
    %v1147 = vpop.f32.mrb[0].mxu0
    %v1148 = vadd.f32 %v613, %v1147
    %v1149 = vpop.f32.mrb[0].mxu0
    %1150 = vdwg.mxu0
    %v1152 = vsel %vm48, %v41, 0
    %v1155 = vsel %vm48, %v42, 0
    %1157 = vmatprep.subr.mxu0 0.0
    %1158 = vmatpush1.xpose.msra.mxu0 %v1152
    %1159 = vmatprep.subr.mxu0 0.0
    %1160 = vmatpush1.xpose.msra.mxu0 %v1155
    %1161 = vmatprep.subr.mxu0 0.0
    %1162 = vmatpush1.xpose.msra.mxu0 0.0
    %1163 = vmatprep.subr.mxu0 0.0
    %1164 = vmatpush1.xpose.msra.mxu0 0.0
    %1165 = vmatprep.subr.mxu0 0.0
    %1166 = vmatpush1.xpose.msra.mxu0 0.0
    %1167 = vmatprep.subr.mxu0 0.0
    %1168 = vmatpush1.xpose.msra.mxu0 0.0
    %1169 = vmatprep.subr.mxu0 0.0
    %1170 = vmatpush1.xpose.msra.mxu0 0.0
    %1171 = vmatprep.subr.mxu0 0.0
    %1172 = vmatpush1.xpose.msra.mxu0 0.0
    %1173 = vmatprep.subr.mxu0 0.0
    %1174 = vmatpush1.xpose.msra.mxu0 0.0
    %1175 = vmatprep.subr.mxu0 0.0
    %1176 = vmatpush1.xpose.msra.mxu0 0.0
    %1177 = vmatprep.subr.mxu0 0.0
    %1178 = vmatpush1.xpose.msra.mxu0 0.0
    %1179 = vmatprep.subr.mxu0 0.0
    %1180 = vmatpush1.xpose.msra.mxu0 0.0
    %1181 = vmatprep.subr.mxu0 0.0
    %1182 = vmatpush1.xpose.msra.mxu0 0.0
    %1183 = vmatprep.subr.mxu0 0.0
    %1184 = vmatpush1.xpose.msra.mxu0 0.0
    %1185 = vmatprep.subr.mxu0 0.0
    %1186 = vmatpush1.xpose.msra.mxu0 0.0
    %1187 = vmatprep.subr.mxu0 0.0
    %1188 = vmatpush1.xpose.msra.mxu0 0.0
    %1189 = vmatprep.subr.mxu0 0.0
    %1190 = vmatpush1.xpose.msra.mxu0 0.0
    %1191 = vmatprep.subr.mxu0 0.0
    %1192 = vmatpush1.xpose.msra.mxu0 0.0
    %1193 = vmatprep.subr.mxu0 0.0
    %1194 = vmatpush1.xpose.msra.mxu0 0.0
    %1195 = vmatprep.subr.mxu0 0.0
    %1196 = vmatpush1.xpose.msra.mxu0 0.0
    %1197 = vmatprep.subr.mxu0 0.0
    %1198 = vmatpush1.xpose.msra.mxu0 0.0
    %1199 = vmatprep.subr.mxu0 0.0
    %1200 = vmatpush1.xpose.msra.mxu0 0.0
    %1201 = vmatprep.subr.mxu0 0.0
    %1202 = vmatpush1.xpose.msra.mxu0 0.0
    %1203 = vmatprep.subr.mxu0 0.0
    %1204 = vmatpush1.xpose.msra.mxu0 0.0
    %1205 = vmatprep.subr.mxu0 0.0
    %1206 = vmatpush1.xpose.msra.mxu0 0.0
    %1207 = vmatprep.subr.mxu0 0.0
    %1208 = vmatpush1.xpose.msra.mxu0 0.0
    %1209 = vmatprep.subr.mxu0 0.0
    %1210 = vmatpush1.xpose.msra.mxu0 0.0
    %1211 = vmatprep.subr.mxu0 0.0
    %1212 = vmatpush1.xpose.msra.mxu0 0.0
    %1213 = vmatprep.subr.mxu0 0.0
    %1214 = vmatpush1.xpose.msra.mxu0 0.0
    %1215 = vmatprep.subr.mxu0 0.0
    %1216 = vmatpush1.xpose.msra.mxu0 0.0
    %1217 = vmatprep.subr.mxu0 0.0
    %1218 = vmatpush1.xpose.msra.mxu0 0.0
    %1219 = vmatprep.subr.mxu0 0.0
    %1220 = vmatpush1.xpose.msra.mxu0 0.0
    %1221 = vmatprep.mubr.f32.mxu0 0.0
    %1222 = vmatmul.mubr.f32.gmra.mrb[0].mxu0 %v617
    %v1223 = vpop.f32.mrb[0].mxu0
    %v1224 = vadd.f32 %v613, %v1223
    %v1225 = vpop.f32.mrb[0].mxu0
    %1226 = vdwg.mxu0
    %v1227 = vlaneseq
    %v1228 = vshrl.u32 %v1227, 7
    %v1229 = vsub.s32 0, %v1228
    %v1230 = vrot.slane %v692, %v1229
    %1232 = vbcast.lane.b32.xlu0 %v1230, 256
    %v1233 = vpop.permute.xlu0 %1232
    %s1235 = sor.u32 256, 8
    %1236 = vbcast.lane.b32.xlu0 %v1230, %s1235
    %v1237 = vpop.permute.xlu0 %1236
    %v1238 = vlaneseq
    %v1239 = vshrl.u32 %v1238, 7
    %v1240 = vsub.s32 1, %v1239
    %v1241 = vrot.slane %v692, %v1240
    %1243 = vbcast.lane.b32.xlu0 %v1241, 256
    %v1244 = vpop.permute.xlu0 %1243
    %s1246 = sor.u32 256, 8
    %1247 = vbcast.lane.b32.xlu0 %v1241, %s1246
    %v1248 = vpop.permute.xlu0 %1247
    %v1249 = vlaneseq
    %v1250 = vshrl.u32 %v1249, 7
    %v1251 = vsub.s32 2, %v1250
    %v1252 = vrot.slane %v692, %v1251
    %1254 = vbcast.lane.b32.xlu0 %v1252, 256
    %v1255 = vpop.permute.xlu0 %1254
    %s1257 = sor.u32 256, 8
    %1258 = vbcast.lane.b32.xlu0 %v1252, %s1257
    %v1259 = vpop.permute.xlu0 %1258
    %v1260 = vlaneseq
    %v1261 = vshrl.u32 %v1260, 7
    %v1262 = vsub.s32 3, %v1261
    %v1263 = vrot.slane %v692, %v1262
    %1265 = vbcast.lane.b32.xlu0 %v1263, 256
    %v1266 = vpop.permute.xlu0 %1265
    %s1268 = sor.u32 256, 8
    %1269 = vbcast.lane.b32.xlu0 %v1263, %s1268
    %v1270 = vpop.permute.xlu0 %1269
    %v1273 = vunpack.c.l.s4 1966171168
    %v1274 = vunpack.c.0.s8 %v1273
    %v1275 = vlaneseq
    %v1276 = vshrl.u32 %v1275, 7
    %v1277 = vsub.s32 %v1274, %v1276
    %v1278 = vrot.slane %v118, %v1277
    %v1279 = vcombine.high %v1278, %v1278
    %v1281 = vunpack.c.l.s4 1966171168
    %v1282 = vunpack.c.0.s8 %v1281
    %v1283 = vlaneseq
    %v1284 = vshrl.u32 %v1283, 7
    %v1285 = vsub.s32 %v1282, %v1284
    %v1286 = vrot.slane %v1278, %v1285
    %v1288 = vunpack.c.l.s4 1966171168
    %v1289 = vunpack.c.0.s8 %v1288
    %v1290 = vlaneseq
    %v1291 = vshrl.u32 %v1290, 7
    %v1292 = vsub.s32 %v1289, %v1291
    %v1293 = vrot.slane %v1279, %v1292
    %v1294 = vcombine.high %v1286, %v1286
    %v1295 = vcombine.high %v1293, %v1293
    %v1296 = vlaneseq
    %v1297 = vshrl.u32 %v1296, 7
    %v1298 = vsub.s32 0, %v1297
    %v1299 = vrot.slane %v1286, %v1298
    %v1300 = vlaneseq
    %v1301 = vshrl.u32 %v1300, 7
    %v1302 = vsub.s32 0, %v1301
    %v1303 = vrot.slane %v1293, %v1302
    %v1304 = vlaneseq
    %v1305 = vshrl.u32 %v1304, 7
    %v1306 = vsub.s32 0, %v1305
    %v1307 = vrot.slane %v1294, %v1306
    %v1308 = vlaneseq
    %v1309 = vshrl.u32 %v1308, 7
    %v1310 = vsub.s32 0, %v1309
    %v1311 = vrot.slane %v1295, %v1310
    %v1316 = vmul.f32 %v1233, %v1299
    %v1317 = vmul.f32 %v1237, %v1299
    %v1318 = vmul.f32 %v1244, %v1303
    %v1319 = vmul.f32 %v1248, %v1303
    %v1320 = vmul.f32 %v1255, %v1307
    %v1321 = vmul.f32 %v1259, %v1307
    %v1322 = vmul.f32 %v1266, %v1311
    %v1323 = vmul.f32 %v1270, %v1311
    %v1324 = vlaneseq
    %v1325 = vshrl.u32 %v1324, 7
    %v1326 = vsub.s32 0, %v1325
    %v1327 = vrot.slane %v768, %v1326
    %1329 = vbcast.lane.b32.xlu0 %v1327, 256
    %v1330 = vpop.permute.xlu0 %1329
    %s1332 = sor.u32 256, 8
    %1333 = vbcast.lane.b32.xlu0 %v1327, %s1332
    %v1334 = vpop.permute.xlu0 %1333
    %v1335 = vlaneseq
    %v1336 = vshrl.u32 %v1335, 7
    %v1337 = vsub.s32 1, %v1336
    %v1338 = vrot.slane %v768, %v1337
    %1340 = vbcast.lane.b32.xlu0 %v1338, 256
    %v1341 = vpop.permute.xlu0 %1340
    %s1343 = sor.u32 256, 8
    %1344 = vbcast.lane.b32.xlu0 %v1338, %s1343
    %v1345 = vpop.permute.xlu0 %1344
    %v1346 = vlaneseq
    %v1347 = vshrl.u32 %v1346, 7
    %v1348 = vsub.s32 2, %v1347
    %v1349 = vrot.slane %v768, %v1348
    %1351 = vbcast.lane.b32.xlu0 %v1349, 256
    %v1352 = vpop.permute.xlu0 %1351
    %s1354 = sor.u32 256, 8
    %1355 = vbcast.lane.b32.xlu0 %v1349, %s1354
    %v1356 = vpop.permute.xlu0 %1355
    %v1357 = vlaneseq
    %v1358 = vshrl.u32 %v1357, 7
    %v1359 = vsub.s32 3, %v1358
    %v1360 = vrot.slane %v768, %v1359
    %1362 = vbcast.lane.b32.xlu0 %v1360, 256
    %v1363 = vpop.permute.xlu0 %1362
    %s1365 = sor.u32 256, 8
    %1366 = vbcast.lane.b32.xlu0 %v1360, %s1365
    %v1367 = vpop.permute.xlu0 %1366
    %v1370 = vunpack.c.l.s4 1966171168
    %v1371 = vunpack.c.0.s8 %v1370
    %v1372 = vlaneseq
    %v1373 = vshrl.u32 %v1372, 7
    %v1374 = vsub.s32 %v1371, %v1373
    %v1375 = vrot.slane %v188, %v1374
    %v1376 = vcombine.high %v1375, %v1375
    %v1378 = vunpack.c.l.s4 1966171168
    %v1379 = vunpack.c.0.s8 %v1378
    %v1380 = vlaneseq
    %v1381 = vshrl.u32 %v1380, 7
    %v1382 = vsub.s32 %v1379, %v1381
    %v1383 = vrot.slane %v1375, %v1382
    %v1385 = vunpack.c.l.s4 1966171168
    %v1386 = vunpack.c.0.s8 %v1385
    %v1387 = vlaneseq
    %v1388 = vshrl.u32 %v1387, 7
    %v1389 = vsub.s32 %v1386, %v1388
    %v1390 = vrot.slane %v1376, %v1389
    %v1391 = vcombine.high %v1383, %v1383
    %v1392 = vcombine.high %v1390, %v1390
    %v1393 = vlaneseq
    %v1394 = vshrl.u32 %v1393, 7
    %v1395 = vsub.s32 0, %v1394
    %v1396 = vrot.slane %v1383, %v1395
    %v1397 = vlaneseq
    %v1398 = vshrl.u32 %v1397, 7
    %v1399 = vsub.s32 0, %v1398
    %v1400 = vrot.slane %v1390, %v1399
    %v1401 = vlaneseq
    %v1402 = vshrl.u32 %v1401, 7
    %v1403 = vsub.s32 0, %v1402
    %v1404 = vrot.slane %v1391, %v1403
    %v1405 = vlaneseq
    %v1406 = vshrl.u32 %v1405, 7
    %v1407 = vsub.s32 0, %v1406
    %v1408 = vrot.slane %v1392, %v1407
    %v1413 = vmul.f32 %v1330, %v1396
    %v1414 = vmul.f32 %v1334, %v1396
    %v1415 = vmul.f32 %v1341, %v1400
    %v1416 = vmul.f32 %v1345, %v1400
    %v1417 = vmul.f32 %v1352, %v1404
    %v1418 = vmul.f32 %v1356, %v1404
    %v1419 = vmul.f32 %v1363, %v1408
    %v1420 = vmul.f32 %v1367, %v1408
    %v1421 = vadd.f32 %v1316, %v1413
    %v1422 = vadd.f32 %v1317, %v1414
    %v1423 = vadd.f32 %v1318, %v1415
    %v1424 = vadd.f32 %v1319, %v1416
    %v1425 = vadd.f32 %v1320, %v1417
    %v1426 = vadd.f32 %v1321, %v1418
    %v1427 = vadd.f32 %v1322, %v1419
    %v1428 = vadd.f32 %v1323, %v1420
    %v1429 = vlaneseq
    %v1430 = vshrl.u32 %v1429, 7
    %v1431 = vsub.s32 0, %v1430
    %v1432 = vrot.slane %v844, %v1431
    %1434 = vbcast.lane.b32.xlu0 %v1432, 256
    %v1435 = vpop.permute.xlu0 %1434
    %s1437 = sor.u32 256, 8
    %1438 = vbcast.lane.b32.xlu0 %v1432, %s1437
    %v1439 = vpop.permute.xlu0 %1438
    %v1440 = vlaneseq
    %v1441 = vshrl.u32 %v1440, 7
    %v1442 = vsub.s32 1, %v1441
    %v1443 = vrot.slane %v844, %v1442
    %1445 = vbcast.lane.b32.xlu0 %v1443, 256
    %v1446 = vpop.permute.xlu0 %1445
    %s1448 = sor.u32 256, 8
    %1449 = vbcast.lane.b32.xlu0 %v1443, %s1448
    %v1450 = vpop.permute.xlu0 %1449
    %v1451 = vlaneseq
    %v1452 = vshrl.u32 %v1451, 7
    %v1453 = vsub.s32 2, %v1452
    %v1454 = vrot.slane %v844, %v1453
    %1456 = vbcast.lane.b32.xlu0 %v1454, 256
    %v1457 = vpop.permute.xlu0 %1456
    %s1459 = sor.u32 256, 8
    %1460 = vbcast.lane.b32.xlu0 %v1454, %s1459
    %v1461 = vpop.permute.xlu0 %1460
    %v1462 = vlaneseq
    %v1463 = vshrl.u32 %v1462, 7
    %v1464 = vsub.s32 3, %v1463
    %v1465 = vrot.slane %v844, %v1464
    %1467 = vbcast.lane.b32.xlu0 %v1465, 256
    %v1468 = vpop.permute.xlu0 %1467
    %s1470 = sor.u32 256, 8
    %1471 = vbcast.lane.b32.xlu0 %v1465, %s1470
    %v1472 = vpop.permute.xlu0 %1471
    %v1475 = vunpack.c.l.s4 1966171168
    %v1476 = vunpack.c.0.s8 %v1475
    %v1477 = vlaneseq
    %v1478 = vshrl.u32 %v1477, 7
    %v1479 = vsub.s32 %v1476, %v1478
    %v1480 = vrot.slane %v258, %v1479
    %v1481 = vcombine.high %v1480, %v1480
    %v1483 = vunpack.c.l.s4 1966171168
    %v1484 = vunpack.c.0.s8 %v1483
    %v1485 = vlaneseq
    %v1486 = vshrl.u32 %v1485, 7
    %v1487 = vsub.s32 %v1484, %v1486
    %v1488 = vrot.slane %v1480, %v1487
    %v1490 = vunpack.c.l.s4 1966171168
    %v1491 = vunpack.c.0.s8 %v1490
    %v1492 = vlaneseq
    %v1493 = vshrl.u32 %v1492, 7
    %v1494 = vsub.s32 %v1491, %v1493
    %v1495 = vrot.slane %v1481, %v1494
    %v1496 = vcombine.high %v1488, %v1488
    %v1497 = vcombine.high %v1495, %v1495
    %v1498 = vlaneseq
    %v1499 = vshrl.u32 %v1498, 7
    %v1500 = vsub.s32 0, %v1499
    %v1501 = vrot.slane %v1488, %v1500
    %v1502 = vlaneseq
    %v1503 = vshrl.u32 %v1502, 7
    %v1504 = vsub.s32 0, %v1503
    %v1505 = vrot.slane %v1495, %v1504
    %v1506 = vlaneseq
    %v1507 = vshrl.u32 %v1506, 7
    %v1508 = vsub.s32 0, %v1507
    %v1509 = vrot.slane %v1496, %v1508
    %v1510 = vlaneseq
    %v1511 = vshrl.u32 %v1510, 7
    %v1512 = vsub.s32 0, %v1511
    %v1513 = vrot.slane %v1497, %v1512
    %v1518 = vmul.f32 %v1435, %v1501
    %v1519 = vmul.f32 %v1439, %v1501
    %v1520 = vmul.f32 %v1446, %v1505
    %v1521 = vmul.f32 %v1450, %v1505
    %v1522 = vmul.f32 %v1457, %v1509
    %v1523 = vmul.f32 %v1461, %v1509
    %v1524 = vmul.f32 %v1468, %v1513
    %v1525 = vmul.f32 %v1472, %v1513
    %v1526 = vadd.f32 %v1421, %v1518
    %v1527 = vadd.f32 %v1422, %v1519
    %v1528 = vadd.f32 %v1423, %v1520
    %v1529 = vadd.f32 %v1424, %v1521
    %v1530 = vadd.f32 %v1425, %v1522
    %v1531 = vadd.f32 %v1426, %v1523
    %v1532 = vadd.f32 %v1427, %v1524
    %v1533 = vadd.f32 %v1428, %v1525
    %v1534 = vlaneseq
    %v1535 = vshrl.u32 %v1534, 7
    %v1536 = vsub.s32 0, %v1535
    %v1537 = vrot.slane %v920, %v1536
    %1539 = vbcast.lane.b32.xlu0 %v1537, 256
    %v1540 = vpop.permute.xlu0 %1539
    %s1542 = sor.u32 256, 8
    %1543 = vbcast.lane.b32.xlu0 %v1537, %s1542
    %v1544 = vpop.permute.xlu0 %1543
    %v1545 = vlaneseq
    %v1546 = vshrl.u32 %v1545, 7
    %v1547 = vsub.s32 1, %v1546
    %v1548 = vrot.slane %v920, %v1547
    %1550 = vbcast.lane.b32.xlu0 %v1548, 256
    %v1551 = vpop.permute.xlu0 %1550
    %s1553 = sor.u32 256, 8
    %1554 = vbcast.lane.b32.xlu0 %v1548, %s1553
    %v1555 = vpop.permute.xlu0 %1554
    %v1556 = vlaneseq
    %v1557 = vshrl.u32 %v1556, 7
    %v1558 = vsub.s32 2, %v1557
    %v1559 = vrot.slane %v920, %v1558
    %1561 = vbcast.lane.b32.xlu0 %v1559, 256
    %v1562 = vpop.permute.xlu0 %1561
    %s1564 = sor.u32 256, 8
    %1565 = vbcast.lane.b32.xlu0 %v1559, %s1564
    %v1566 = vpop.permute.xlu0 %1565
    %v1567 = vlaneseq
    %v1568 = vshrl.u32 %v1567, 7
    %v1569 = vsub.s32 3, %v1568
    %v1570 = vrot.slane %v920, %v1569
    %1572 = vbcast.lane.b32.xlu0 %v1570, 256
    %v1573 = vpop.permute.xlu0 %1572
    %s1575 = sor.u32 256, 8
    %1576 = vbcast.lane.b32.xlu0 %v1570, %s1575
    %v1577 = vpop.permute.xlu0 %1576
    %v1580 = vunpack.c.l.s4 1966171168
    %v1581 = vunpack.c.0.s8 %v1580
    %v1582 = vlaneseq
    %v1583 = vshrl.u32 %v1582, 7
    %v1584 = vsub.s32 %v1581, %v1583
    %v1585 = vrot.slane %v328, %v1584
    %v1586 = vcombine.high %v1585, %v1585
    %v1588 = vunpack.c.l.s4 1966171168
    %v1589 = vunpack.c.0.s8 %v1588
    %v1590 = vlaneseq
    %v1591 = vshrl.u32 %v1590, 7
    %v1592 = vsub.s32 %v1589, %v1591
    %v1593 = vrot.slane %v1585, %v1592
    %v1595 = vunpack.c.l.s4 1966171168
    %v1596 = vunpack.c.0.s8 %v1595
    %v1597 = vlaneseq
    %v1598 = vshrl.u32 %v1597, 7
    %v1599 = vsub.s32 %v1596, %v1598
    %v1600 = vrot.slane %v1586, %v1599
    %v1601 = vcombine.high %v1593, %v1593
    %v1602 = vcombine.high %v1600, %v1600
    %v1603 = vlaneseq
    %v1604 = vshrl.u32 %v1603, 7
    %v1605 = vsub.s32 0, %v1604
    %v1606 = vrot.slane %v1593, %v1605
    %v1607 = vlaneseq
    %v1608 = vshrl.u32 %v1607, 7
    %v1609 = vsub.s32 0, %v1608
    %v1610 = vrot.slane %v1600, %v1609
    %v1611 = vlaneseq
    %v1612 = vshrl.u32 %v1611, 7
    %v1613 = vsub.s32 0, %v1612
    %v1614 = vrot.slane %v1601, %v1613
    %v1615 = vlaneseq
    %v1616 = vshrl.u32 %v1615, 7
    %v1617 = vsub.s32 0, %v1616
    %v1618 = vrot.slane %v1602, %v1617
    %v1623 = vmul.f32 %v1540, %v1606
    %v1624 = vmul.f32 %v1544, %v1606
    %v1625 = vmul.f32 %v1551, %v1610
    %v1626 = vmul.f32 %v1555, %v1610
    %v1627 = vmul.f32 %v1562, %v1614
    %v1628 = vmul.f32 %v1566, %v1614
    %v1629 = vmul.f32 %v1573, %v1618
    %v1630 = vmul.f32 %v1577, %v1618
    %v1631 = vadd.f32 %v1526, %v1623
    %v1632 = vadd.f32 %v1527, %v1624
    %v1633 = vadd.f32 %v1528, %v1625
    %v1634 = vadd.f32 %v1529, %v1626
    %v1635 = vadd.f32 %v1530, %v1627
    %v1636 = vadd.f32 %v1531, %v1628
    %v1637 = vadd.f32 %v1532, %v1629
    %v1638 = vadd.f32 %v1533, %v1630
    %v1639 = vxor.u32 %v1631, 2147483648
    %v1640 = vxor.u32 %v1632, 2147483648
    %v1641 = vxor.u32 %v1633, 2147483648
    %v1642 = vxor.u32 %v1634, 2147483648
    %v1643 = vxor.u32 %v1635, 2147483648
    %v1644 = vxor.u32 %v1636, 2147483648
    %v1645 = vxor.u32 %v1637, 2147483648
    %v1646 = vxor.u32 %v1638, 2147483648
    %v1647 = vmul.f32 %v1639, 1.442695
    %v1648 = vpow.pop %v1647
    %v1649 = vmul.f32 %v1640, 1.442695
    %v1650 = vpow.pop %v1649
    %v1651 = vmul.f32 %v1641, 1.442695
    %v1652 = vpow.pop %v1651
    %v1653 = vmul.f32 %v1642, 1.442695
    %v1654 = vpow.pop %v1653
    %v1655 = vmul.f32 %v1643, 1.442695
    %v1656 = vpow.pop %v1655
    %v1657 = vmul.f32 %v1644, 1.442695
    %v1658 = vpow.pop %v1657
    %v1659 = vmul.f32 %v1645, 1.442695
    %v1660 = vpow.pop %v1659
    %v1661 = vmul.f32 %v1646, 1.442695
    %v1662 = vpow.pop %v1661
    %v1663 = vadd.f32 %v1648, 1.0
    %v1664 = vadd.f32 %v1650, 1.0
    %v1665 = vadd.f32 %v1652, 1.0
    %v1666 = vadd.f32 %v1654, 1.0
    %v1667 = vadd.f32 %v1656, 1.0
    %v1668 = vadd.f32 %v1658, 1.0
    %v1669 = vadd.f32 %v1660, 1.0
    %v1670 = vadd.f32 %v1662, 1.0
    %v1671 = vrcp.pop %v1663
    %v1672 = vmul.f32 1.0, %v1671
    %v1673 = vrcp.pop %v1664
    %v1674 = vmul.f32 1.0, %v1673
    %v1675 = vrcp.pop %v1665
    %v1676 = vmul.f32 1.0, %v1675
    %v1677 = vrcp.pop %v1666
    %v1678 = vmul.f32 1.0, %v1677
    %v1679 = vrcp.pop %v1667
    %v1680 = vmul.f32 1.0, %v1679
    %v1681 = vrcp.pop %v1668
    %v1682 = vmul.f32 1.0, %v1681
    %v1683 = vrcp.pop %v1669
    %v1684 = vmul.f32 1.0, %v1683
    %v1685 = vrcp.pop %v1670
    %v1686 = vmul.f32 1.0, %v1685
    %1687 = vst.msk [vmem:[#allocation5] sm:$0xff] %vm48, %v1672
    %1688 = vst.msk [vmem:[#allocation5 + $0x8] sm:$0xff] %vm48, %v1674
    %1689 = vst.msk [vmem:[#allocation5 + $0x10] sm:$0xff] %vm48, %v1676
    %1690 = vst.msk [vmem:[#allocation5 + $0x18] sm:$0xff] %vm48, %v1678
    %1691 = vst.msk [vmem:[#allocation5 + $0x20] sm:$0xff] %vm48, %v1680
    %1692 = vst.msk [vmem:[#allocation5 + $0x28] sm:$0xff] %vm48, %v1682
    %1693 = vst.msk [vmem:[#allocation5 + $0x30] sm:$0xff] %vm48, %v1684
    %1694 = vst.msk [vmem:[#allocation5 + $0x38] sm:$0xff] %vm48, %v1686
    %v1695 = vlaneseq
    %v1696 = vshrl.u32 %v1695, 7
    %v1697 = vsub.s32 0, %v1696
    %v1698 = vrot.slane %v996, %v1697
    %1700 = vbcast.lane.b32.xlu0 %v1698, 256
    %v1701 = vpop.permute.xlu0 %1700
    %s1703 = sor.u32 256, 8
    %1704 = vbcast.lane.b32.xlu0 %v1698, %s1703
    %v1705 = vpop.permute.xlu0 %1704
    %v1706 = vlaneseq
    %v1707 = vshrl.u32 %v1706, 7
    %v1708 = vsub.s32 1, %v1707
    %v1709 = vrot.slane %v996, %v1708
    %1711 = vbcast.lane.b32.xlu0 %v1709, 256
    %v1712 = vpop.permute.xlu0 %1711
    %s1714 = sor.u32 256, 8
    %1715 = vbcast.lane.b32.xlu0 %v1709, %s1714
    %v1716 = vpop.permute.xlu0 %1715
    %v1717 = vlaneseq
    %v1718 = vshrl.u32 %v1717, 7
    %v1719 = vsub.s32 2, %v1718
    %v1720 = vrot.slane %v996, %v1719
    %1722 = vbcast.lane.b32.xlu0 %v1720, 256
    %v1723 = vpop.permute.xlu0 %1722
    %s1725 = sor.u32 256, 8
    %1726 = vbcast.lane.b32.xlu0 %v1720, %s1725
    %v1727 = vpop.permute.xlu0 %1726
    %v1728 = vlaneseq
    %v1729 = vshrl.u32 %v1728, 7
    %v1730 = vsub.s32 3, %v1729
    %v1731 = vrot.slane %v996, %v1730
    %1733 = vbcast.lane.b32.xlu0 %v1731, 256
    %v1734 = vpop.permute.xlu0 %1733
    %s1736 = sor.u32 256, 8
    %1737 = vbcast.lane.b32.xlu0 %v1731, %s1736
    %v1738 = vpop.permute.xlu0 %1737
    %v1741 = vunpack.c.l.s4 1966171168
    %v1742 = vunpack.c.0.s8 %v1741
    %v1743 = vlaneseq
    %v1744 = vshrl.u32 %v1743, 7
    %v1745 = vsub.s32 %v1742, %v1744
    %v1746 = vrot.slane %v398, %v1745
    %v1747 = vcombine.high %v1746, %v1746
    %v1749 = vunpack.c.l.s4 1966171168
    %v1750 = vunpack.c.0.s8 %v1749
    %v1751 = vlaneseq
    %v1752 = vshrl.u32 %v1751, 7
    %v1753 = vsub.s32 %v1750, %v1752
    %v1754 = vrot.slane %v1746, %v1753
    %v1756 = vunpack.c.l.s4 1966171168
    %v1757 = vunpack.c.0.s8 %v1756
    %v1758 = vlaneseq
    %v1759 = vshrl.u32 %v1758, 7
    %v1760 = vsub.s32 %v1757, %v1759
    %v1761 = vrot.slane %v1747, %v1760
    %v1762 = vcombine.high %v1754, %v1754
    %v1763 = vcombine.high %v1761, %v1761
    %v1764 = vlaneseq
    %v1765 = vshrl.u32 %v1764, 7
    %v1766 = vsub.s32 0, %v1765
    %v1767 = vrot.slane %v1754, %v1766
    %v1768 = vlaneseq
    %v1769 = vshrl.u32 %v1768, 7
    %v1770 = vsub.s32 0, %v1769
    %v1771 = vrot.slane %v1761, %v1770
    %v1772 = vlaneseq
    %v1773 = vshrl.u32 %v1772, 7
    %v1774 = vsub.s32 0, %v1773
    %v1775 = vrot.slane %v1762, %v1774
    %v1776 = vlaneseq
    %v1777 = vshrl.u32 %v1776, 7
    %v1778 = vsub.s32 0, %v1777
    %v1779 = vrot.slane %v1763, %v1778
    %v1784 = vmul.f32 %v1701, %v1767
    %v1785 = vmul.f32 %v1705, %v1767
    %v1786 = vmul.f32 %v1712, %v1771
    %v1787 = vmul.f32 %v1716, %v1771
    %v1788 = vmul.f32 %v1723, %v1775
    %v1789 = vmul.f32 %v1727, %v1775
    %v1790 = vmul.f32 %v1734, %v1779
    %v1791 = vmul.f32 %v1738, %v1779
    %v1792 = vlaneseq
    %v1793 = vshrl.u32 %v1792, 7
    %v1794 = vsub.s32 0, %v1793
    %v1795 = vrot.slane %v1072, %v1794
    %1797 = vbcast.lane.b32.xlu0 %v1795, 256
    %v1798 = vpop.permute.xlu0 %1797
    %s1800 = sor.u32 256, 8
    %1801 = vbcast.lane.b32.xlu0 %v1795, %s1800
    %v1802 = vpop.permute.xlu0 %1801
    %v1803 = vlaneseq
    %v1804 = vshrl.u32 %v1803, 7
    %v1805 = vsub.s32 1, %v1804
    %v1806 = vrot.slane %v1072, %v1805
    %1808 = vbcast.lane.b32.xlu0 %v1806, 256
    %v1809 = vpop.permute.xlu0 %1808
    %s1811 = sor.u32 256, 8
    %1812 = vbcast.lane.b32.xlu0 %v1806, %s1811
    %v1813 = vpop.permute.xlu0 %1812
    %v1814 = vlaneseq
    %v1815 = vshrl.u32 %v1814, 7
    %v1816 = vsub.s32 2, %v1815
    %v1817 = vrot.slane %v1072, %v1816
    %1819 = vbcast.lane.b32.xlu0 %v1817, 256
    %v1820 = vpop.permute.xlu0 %1819
    %s1822 = sor.u32 256, 8
    %1823 = vbcast.lane.b32.xlu0 %v1817, %s1822
    %v1824 = vpop.permute.xlu0 %1823
    %v1825 = vlaneseq
    %v1826 = vshrl.u32 %v1825, 7
    %v1827 = vsub.s32 3, %v1826
    %v1828 = vrot.slane %v1072, %v1827
    %1830 = vbcast.lane.b32.xlu0 %v1828, 256
    %v1831 = vpop.permute.xlu0 %1830
    %s1833 = sor.u32 256, 8
    %1834 = vbcast.lane.b32.xlu0 %v1828, %s1833
    %v1835 = vpop.permute.xlu0 %1834
    %v1838 = vunpack.c.l.s4 1966171168
    %v1839 = vunpack.c.0.s8 %v1838
    %v1840 = vlaneseq
    %v1841 = vshrl.u32 %v1840, 7
    %v1842 = vsub.s32 %v1839, %v1841
    %v1843 = vrot.slane %v468, %v1842
    %v1844 = vcombine.high %v1843, %v1843
    %v1846 = vunpack.c.l.s4 1966171168
    %v1847 = vunpack.c.0.s8 %v1846
    %v1848 = vlaneseq
    %v1849 = vshrl.u32 %v1848, 7
    %v1850 = vsub.s32 %v1847, %v1849
    %v1851 = vrot.slane %v1843, %v1850
    %v1853 = vunpack.c.l.s4 1966171168
    %v1854 = vunpack.c.0.s8 %v1853
    %v1855 = vlaneseq
    %v1856 = vshrl.u32 %v1855, 7
    %v1857 = vsub.s32 %v1854, %v1856
    %v1858 = vrot.slane %v1844, %v1857
    %v1859 = vcombine.high %v1851, %v1851
    %v1860 = vcombine.high %v1858, %v1858
    %v1861 = vlaneseq
    %v1862 = vshrl.u32 %v1861, 7
    %v1863 = vsub.s32 0, %v1862
    %v1864 = vrot.slane %v1851, %v1863
    %v1865 = vlaneseq
    %v1866 = vshrl.u32 %v1865, 7
    %v1867 = vsub.s32 0, %v1866
    %v1868 = vrot.slane %v1858, %v1867
    %v1869 = vlaneseq
    %v1870 = vshrl.u32 %v1869, 7
    %v1871 = vsub.s32 0, %v1870
    %v1872 = vrot.slane %v1859, %v1871
    %v1873 = vlaneseq
    %v1874 = vshrl.u32 %v1873, 7
    %v1875 = vsub.s32 0, %v1874
    %v1876 = vrot.slane %v1860, %v1875
    %v1881 = vmul.f32 %v1798, %v1864
    %v1882 = vmul.f32 %v1802, %v1864
    %v1883 = vmul.f32 %v1809, %v1868
    %v1884 = vmul.f32 %v1813, %v1868
    %v1885 = vmul.f32 %v1820, %v1872
    %v1886 = vmul.f32 %v1824, %v1872
    %v1887 = vmul.f32 %v1831, %v1876
    %v1888 = vmul.f32 %v1835, %v1876
    %v1889 = vadd.f32 %v1784, %v1881
    %v1890 = vadd.f32 %v1785, %v1882
    %v1891 = vadd.f32 %v1786, %v1883
    %v1892 = vadd.f32 %v1787, %v1884
    %v1893 = vadd.f32 %v1788, %v1885
    %v1894 = vadd.f32 %v1789, %v1886
    %v1895 = vadd.f32 %v1790, %v1887
    %v1896 = vadd.f32 %v1791, %v1888
    %v1897 = vlaneseq
    %v1898 = vshrl.u32 %v1897, 7
    %v1899 = vsub.s32 0, %v1898
    %v1900 = vrot.slane %v1148, %v1899
    %1902 = vbcast.lane.b32.xlu0 %v1900, 256
    %v1903 = vpop.permute.xlu0 %1902
    %s1905 = sor.u32 256, 8
    %1906 = vbcast.lane.b32.xlu0 %v1900, %s1905
    %v1907 = vpop.permute.xlu0 %1906
    %v1908 = vlaneseq
    %v1909 = vshrl.u32 %v1908, 7
    %v1910 = vsub.s32 1, %v1909
    %v1911 = vrot.slane %v1148, %v1910
    %1913 = vbcast.lane.b32.xlu0 %v1911, 256
    %v1914 = vpop.permute.xlu0 %1913
    %s1916 = sor.u32 256, 8
    %1917 = vbcast.lane.b32.xlu0 %v1911, %s1916
    %v1918 = vpop.permute.xlu0 %1917
    %v1919 = vlaneseq
    %v1920 = vshrl.u32 %v1919, 7
    %v1921 = vsub.s32 2, %v1920
    %v1922 = vrot.slane %v1148, %v1921
    %1924 = vbcast.lane.b32.xlu0 %v1922, 256
    %v1925 = vpop.permute.xlu0 %1924
    %s1927 = sor.u32 256, 8
    %1928 = vbcast.lane.b32.xlu0 %v1922, %s1927
    %v1929 = vpop.permute.xlu0 %1928
    %v1930 = vlaneseq
    %v1931 = vshrl.u32 %v1930, 7
    %v1932 = vsub.s32 3, %v1931
    %v1933 = vrot.slane %v1148, %v1932
    %1935 = vbcast.lane.b32.xlu0 %v1933, 256
    %v1936 = vpop.permute.xlu0 %1935
    %s1938 = sor.u32 256, 8
    %1939 = vbcast.lane.b32.xlu0 %v1933, %s1938
    %v1940 = vpop.permute.xlu0 %1939
    %v1943 = vunpack.c.l.s4 1966171168
    %v1944 = vunpack.c.0.s8 %v1943
    %v1945 = vlaneseq
    %v1946 = vshrl.u32 %v1945, 7
    %v1947 = vsub.s32 %v1944, %v1946
    %v1948 = vrot.slane %v538, %v1947
    %v1949 = vcombine.high %v1948, %v1948
    %v1951 = vunpack.c.l.s4 1966171168
    %v1952 = vunpack.c.0.s8 %v1951
    %v1953 = vlaneseq
    %v1954 = vshrl.u32 %v1953, 7
    %v1955 = vsub.s32 %v1952, %v1954
    %v1956 = vrot.slane %v1948, %v1955
    %v1958 = vunpack.c.l.s4 1966171168
    %v1959 = vunpack.c.0.s8 %v1958
    %v1960 = vlaneseq
    %v1961 = vshrl.u32 %v1960, 7
    %v1962 = vsub.s32 %v1959, %v1961
    %v1963 = vrot.slane %v1949, %v1962
    %v1964 = vcombine.high %v1956, %v1956
    %v1965 = vcombine.high %v1963, %v1963
    %v1966 = vlaneseq
    %v1967 = vshrl.u32 %v1966, 7
    %v1968 = vsub.s32 0, %v1967
    %v1969 = vrot.slane %v1956, %v1968
    %v1970 = vlaneseq
    %v1971 = vshrl.u32 %v1970, 7
    %v1972 = vsub.s32 0, %v1971
    %v1973 = vrot.slane %v1963, %v1972
    %v1974 = vlaneseq
    %v1975 = vshrl.u32 %v1974, 7
    %v1976 = vsub.s32 0, %v1975
    %v1977 = vrot.slane %v1964, %v1976
    %v1978 = vlaneseq
    %v1979 = vshrl.u32 %v1978, 7
    %v1980 = vsub.s32 0, %v1979
    %v1981 = vrot.slane %v1965, %v1980
    %v1986 = vmul.f32 %v1903, %v1969
    %v1987 = vmul.f32 %v1907, %v1969
    %v1988 = vmul.f32 %v1914, %v1973
    %v1989 = vmul.f32 %v1918, %v1973
    %v1990 = vmul.f32 %v1925, %v1977
    %v1991 = vmul.f32 %v1929, %v1977
    %v1992 = vmul.f32 %v1936, %v1981
    %v1993 = vmul.f32 %v1940, %v1981
    %v1994 = vadd.f32 %v1889, %v1986
    %v1995 = vadd.f32 %v1890, %v1987
    %v1996 = vadd.f32 %v1891, %v1988
    %v1997 = vadd.f32 %v1892, %v1989
    %v1998 = vadd.f32 %v1893, %v1990
    %v1999 = vadd.f32 %v1894, %v1991
    %v2000 = vadd.f32 %v1895, %v1992
    %v2001 = vadd.f32 %v1896, %v1993
    %v2002 = vlaneseq
    %v2003 = vshrl.u32 %v2002, 7
    %v2004 = vsub.s32 0, %v2003
    %v2005 = vrot.slane %v1224, %v2004
    %2007 = vbcast.lane.b32.xlu0 %v2005, 256
    %v2008 = vpop.permute.xlu0 %2007
    %s2010 = sor.u32 256, 8
    %2011 = vbcast.lane.b32.xlu0 %v2005, %s2010
    %v2012 = vpop.permute.xlu0 %2011
    %v2013 = vlaneseq
    %v2014 = vshrl.u32 %v2013, 7
    %v2015 = vsub.s32 1, %v2014
    %v2016 = vrot.slane %v1224, %v2015
    %2018 = vbcast.lane.b32.xlu0 %v2016, 256
    %v2019 = vpop.permute.xlu0 %2018
    %s2021 = sor.u32 256, 8
    %2022 = vbcast.lane.b32.xlu0 %v2016, %s2021
    %v2023 = vpop.permute.xlu0 %2022
    %v2024 = vlaneseq
    %v2025 = vshrl.u32 %v2024, 7
    %v2026 = vsub.s32 2, %v2025
    %v2027 = vrot.slane %v1224, %v2026
    %2029 = vbcast.lane.b32.xlu0 %v2027, 256
    %v2030 = vpop.permute.xlu0 %2029
    %s2032 = sor.u32 256, 8
    %2033 = vbcast.lane.b32.xlu0 %v2027, %s2032
    %v2034 = vpop.permute.xlu0 %2033
    %v2035 = vlaneseq
    %v2036 = vshrl.u32 %v2035, 7
    %v2037 = vsub.s32 3, %v2036
    %v2038 = vrot.slane %v1224, %v2037
    %2040 = vbcast.lane.b32.xlu0 %v2038, 256
    %v2041 = vpop.permute.xlu0 %2040
    %s2043 = sor.u32 256, 8
    %2044 = vbcast.lane.b32.xlu0 %v2038, %s2043
    %v2045 = vpop.permute.xlu0 %2044
    %v2048 = vunpack.c.l.s4 1966171168
    %v2049 = vunpack.c.0.s8 %v2048
    %v2050 = vlaneseq
    %v2051 = vshrl.u32 %v2050, 7
    %v2052 = vsub.s32 %v2049, %v2051
    %v2053 = vrot.slane %v608, %v2052
    %v2054 = vcombine.high %v2053, %v2053
    %v2056 = vunpack.c.l.s4 1966171168
    %v2057 = vunpack.c.0.s8 %v2056
    %v2058 = vlaneseq
    %v2059 = vshrl.u32 %v2058, 7
    %v2060 = vsub.s32 %v2057, %v2059
    %v2061 = vrot.slane %v2053, %v2060
    %v2063 = vunpack.c.l.s4 1966171168
    %v2064 = vunpack.c.0.s8 %v2063
    %v2065 = vlaneseq
    %v2066 = vshrl.u32 %v2065, 7
    %v2067 = vsub.s32 %v2064, %v2066
    %v2068 = vrot.slane %v2054, %v2067
    %v2069 = vcombine.high %v2061, %v2061
    %v2070 = vcombine.high %v2068, %v2068
    %v2071 = vlaneseq
    %v2072 = vshrl.u32 %v2071, 7
    %v2073 = vsub.s32 0, %v2072
    %v2074 = vrot.slane %v2061, %v2073
    %v2075 = vlaneseq
    %v2076 = vshrl.u32 %v2075, 7
    %v2077 = vsub.s32 0, %v2076
    %v2078 = vrot.slane %v2068, %v2077
    %v2079 = vlaneseq
    %v2080 = vshrl.u32 %v2079, 7
    %v2081 = vsub.s32 0, %v2080
    %v2082 = vrot.slane %v2069, %v2081
    %v2083 = vlaneseq
    %v2084 = vshrl.u32 %v2083, 7
    %v2085 = vsub.s32 0, %v2084
    %v2086 = vrot.slane %v2070, %v2085
    %v2091 = vmul.f32 %v2008, %v2074
    %v2092 = vmul.f32 %v2012, %v2074
    %v2093 = vmul.f32 %v2019, %v2078
    %v2094 = vmul.f32 %v2023, %v2078
    %v2095 = vmul.f32 %v2030, %v2082
    %v2096 = vmul.f32 %v2034, %v2082
    %v2097 = vmul.f32 %v2041, %v2086
    %v2098 = vmul.f32 %v2045, %v2086
    %v2099 = vadd.f32 %v1994, %v2091
    %v2100 = vadd.f32 %v1995, %v2092
    %v2101 = vadd.f32 %v1996, %v2093
    %v2102 = vadd.f32 %v1997, %v2094
    %v2103 = vadd.f32 %v1998, %v2095
    %v2104 = vadd.f32 %v1999, %v2096
    %v2105 = vadd.f32 %v2000, %v2097
    %v2106 = vadd.f32 %v2001, %v2098
    %v2107 = vxor.u32 %v2099, 2147483648
    %v2108 = vxor.u32 %v2100, 2147483648
    %v2109 = vxor.u32 %v2101, 2147483648
    %v2110 = vxor.u32 %v2102, 2147483648
    %v2111 = vxor.u32 %v2103, 2147483648
    %v2112 = vxor.u32 %v2104, 2147483648
    %v2113 = vxor.u32 %v2105, 2147483648
    %v2114 = vxor.u32 %v2106, 2147483648
    %v2115 = vmul.f32 %v2107, 1.442695
    %v2116 = vpow.pop %v2115
    %v2117 = vmul.f32 %v2108, 1.442695
    %v2118 = vpow.pop %v2117
    %v2119 = vmul.f32 %v2109, 1.442695
    %v2120 = vpow.pop %v2119
    %v2121 = vmul.f32 %v2110, 1.442695
    %v2122 = vpow.pop %v2121
    %v2123 = vmul.f32 %v2111, 1.442695
    %v2124 = vpow.pop %v2123
    %v2125 = vmul.f32 %v2112, 1.442695
    %v2126 = vpow.pop %v2125
    %v2127 = vmul.f32 %v2113, 1.442695
    %v2128 = vpow.pop %v2127
    %v2129 = vmul.f32 %v2114, 1.442695
    %v2130 = vpow.pop %v2129
    %v2131 = vadd.f32 %v2116, 1.0
    %v2132 = vadd.f32 %v2118, 1.0
    %v2133 = vadd.f32 %v2120, 1.0
    %v2134 = vadd.f32 %v2122, 1.0
    %v2135 = vadd.f32 %v2124, 1.0
    %v2136 = vadd.f32 %v2126, 1.0
    %v2137 = vadd.f32 %v2128, 1.0
    %v2138 = vadd.f32 %v2130, 1.0
    %v2139 = vrcp.pop %v2131
    %v2140 = vmul.f32 1.0, %v2139
    %v2141 = vrcp.pop %v2132
    %v2142 = vmul.f32 1.0, %v2141
    %v2143 = vrcp.pop %v2133
    %v2144 = vmul.f32 1.0, %v2143
    %v2145 = vrcp.pop %v2134
    %v2146 = vmul.f32 1.0, %v2145
    %v2147 = vrcp.pop %v2135
    %v2148 = vmul.f32 1.0, %v2147
    %v2149 = vrcp.pop %v2136
    %v2150 = vmul.f32 1.0, %v2149
    %v2151 = vrcp.pop %v2137
    %v2152 = vmul.f32 1.0, %v2151
    %v2153 = vrcp.pop %v2138
    %v2154 = vmul.f32 1.0, %v2153
    %s2155 = scalar_lea.vmem [#allocation5], 64
    %2156 = vst.msk [vmem:[%s2155] sm:$0xff] %vm48, %v2140
    %2157 = vst.msk [vmem:[%s2155 + $0x8] sm:$0xff] %vm48, %v2142
    %2158 = vst.msk [vmem:[%s2155 + $0x10] sm:$0xff] %vm48, %v2144
    %2159 = vst.msk [vmem:[%s2155 + $0x18] sm:$0xff] %vm48, %v2146
    %2160 = vst.msk [vmem:[%s2155 + $0x20] sm:$0xff] %vm48, %v2148
    %2161 = vst.msk [vmem:[%s2155 + $0x28] sm:$0xff] %vm48, %v2150
    %2162 = vst.msk [vmem:[%s2155 + $0x30] sm:$0xff] %vm48, %v2152
    %2163 = vst.msk [vmem:[%s2155 + $0x38] sm:$0xff] %vm48, %v2154
    // Predicated region
    $region14: #{sam_forward.1} parent=1 // pred_check
      _
    $region15: #{sam_forward.1} parent=1 // pred_check_branch
      %2165 = sbr.rel (0) target = $region17
    $region16: #{sam_forward.1} parent=1 // pred_region
      %s2167 = ssub.s32 2048, 2048
      %2168 = vsyncadd [#allocation4], %s2167
      %s2169 = sshll.u32 [#allocation5], 4
      %s2170 = int_to_ptr.vmem [resolvable:$true] %s2169
      %2175 = dma.vmem_to_hbm [thread:$0]  %s2170, 2048, %s2, [#allocation4], 128, 128, 8
    $region17: #{sam_forward.1} parent=1 // pred_fallthru
      _
    // Predicated region
    $region18: #{sam_forward.1} parent=1 // pred_check
      _
    $region19: #{sam_forward.1} parent=1 // pred_check_branch
      %2177 = sbr.rel (0) target = $region21
    $region20: #{sam_forward.1} parent=1 // pred_region
      %2178 = dma.done [#allocation4], 2048
    $region21: #{sam_forward.1} parent=1 // pred_fallthru
      _
    %2179 = vsyncpa [#allocation3], 1
    %2180 = vsyncpa [#allocation4], 1

</llo_original>
